<compile_context>
chip_gen: v7x
topology: tpu7x:2x2x1
jax: 0.10.0
libtpu: 0.0.40
codegen_flags: <defaults>
</compile_context>

<pallas_src>
import functools

import jax
import jax.numpy as jnp
from jax.experimental import pallas as pl
from jax.experimental.pallas import tpu as pltpu


def _round_up(x, m):
    return ((x + m - 1) // m) * m


def _pick_row_tile(n, target):
    """Largest tm | n with tm <= target, preferring multiples of 128 (lane-dense stores)."""
    if n <= target:
        return n
    t = (min(target, n) // 128) * 128
    while t >= 128:
        if n % t == 0:
            return t
        t -= 128
    return n  # fallback: whole row dim (still correct, just a bigger block)


# ----------------------------------------------------------------------------
# Fused fp1 MLP (3x Conv1d+BN+ReLU) + output head (Conv1d+BN+ReLU, Conv1d)
# One pallas_call; output written transposed (lane-dense) directly as [B, emb, N].
# ----------------------------------------------------------------------------
def _fp1_head_kernel(x1_ref, x2_ref, *refs, num_layers, relu_flags):
    o_ref = refs[-1]
    lrefs = refs[:-1]

    # Layer 0: split-K matmul over the two inputs (avoids materializing the [M, 68] concat).
    w0a = lrefs[0][...]
    w0b = lrefs[1][...]
    b0 = lrefs[2][...]
    y = jnp.dot(x1_ref[...], w0a, preferred_element_type=jnp.float32)
    y = y + jnp.dot(x2_ref[...], w0b, preferred_element_type=jnp.float32)
    y = y + b0
    if relu_flags[0]:
        y = jnp.maximum(y, 0.0)
    h = y.astype(jnp.bfloat16)

    off = 3
    for li in range(1, num_layers):
        w = lrefs[off][...]
        b = lrefs[off + 1][...]
        off += 2
        y = jnp.dot(h, w, preferred_element_type=jnp.float32) + b
        if relu_flags[li]:
            y = jnp.maximum(y, 0.0)
        if li + 1 < num_layers:
            h = y.astype(jnp.bfloat16)

    # In-kernel transpose (XLU) -> lane-dense [emb, tm] block stored straight into [B, emb, N].
    yt = jnp.transpose(y, (1, 0))
    o_ref[...] = yt[None].astype(o_ref.dtype)


def fp1_head_mlp(x1, x2, layers, *, B, N, emb, relu_flags, tm_target=2048,
                 out_dtype=jnp.float32):
    """x1: [B*N, c1] bf16, x2: [B*N, c2] bf16.  layers: list of (w[bf16, Cin, Cout], bias[f32]).

    Layer 0's weight must have Cin == c1 + c2 (it is split in here).  Returns [B, emb, N].
    """
    c1 = x1.shape[1]
    c2 = x2.shape[1]
    tm = _pick_row_tile(N, tm_target)
    assert N % tm == 0
    assert tm % 8 == 0 or B == 1, "row tile must be sublane-aligned"
    nj = N // tm

    w0, b0 = layers[0]
    co0 = w0.shape[1]
    w0a, w0b = w0[:c1], w0[c1:]

    flat_args = [x1, x2, w0a, w0b, b0.reshape(1, co0)]
    in_specs = [
        pl.BlockSpec((tm, c1), lambda b, j: (b * nj + j, 0)),
        pl.BlockSpec((tm, c2), lambda b, j: (b * nj + j, 0)),
        pl.BlockSpec((c1, co0), lambda b, j: (0, 0)),
        pl.BlockSpec((c2, co0), lambda b, j: (0, 0)),
        pl.BlockSpec((1, co0), lambda b, j: (0, 0)),
    ]
    for (w, bias) in layers[1:]:
        ci, co = w.shape
        flat_args += [w, bias.reshape(1, co)]
        in_specs += [
            pl.BlockSpec((ci, co), lambda b, j: (0, 0)),
            pl.BlockSpec((1, co), lambda b, j: (0, 0)),
        ]

    kernel = functools.partial(
        _fp1_head_kernel, num_layers=len(layers), relu_flags=tuple(relu_flags))
    out = pl.pallas_call(
        kernel,
        out_shape=jax.ShapeDtypeStruct((B, emb, N), out_dtype),
        grid=(B, nj),
        in_specs=in_specs,
        out_specs=pl.BlockSpec((1, emb, tm), lambda b, j: (b, 0, j)),
        compiler_params=pltpu.CompilerParams(
            dimension_semantics=("parallel", "parallel"),
            vmem_limit_bytes=48 * 1024 * 1024),
    )(*flat_args)
    return out


# ----------------------------------------------------------------------------
# Fused sa1 MLP (3x Conv2d+BN+ReLU) + max over nsample, one pallas_call.
# ----------------------------------------------------------------------------
def _sa1_mlp_max_kernel(x_ref, *refs, num_layers, nsample):
    o_ref = refs[-1]
    lrefs = refs[:-1]

    h = x_ref[...]  # [tg*ns, cin] bf16
    for li in range(num_layers):
        w = lrefs[2 * li][...]
        b = lrefs[2 * li + 1][...]
        y = jnp.dot(h, w, preferred_element_type=jnp.float32)
        y = jnp.maximum(y + b, 0.0)
        h = y.astype(jnp.bfloat16) if li + 1 < num_layers else y

    rows, cout = h.shape
    tg = rows // nsample
    # torch.max(new_points, 2)[0]: max over the nsample axis, fused into the same kernel.
    o_ref[...] = jnp.max(h.reshape(tg, nsample, cout), axis=1).astype(o_ref.dtype)


def sa1_mlp_max(x, layers, *, nsample, tg_target=256, out_dtype=jnp.bfloat16):
    """x: [G*nsample, Cin] bf16 grouped features -> [G, Cout_last] (MLP stack + max)."""
    rows, cin = x.shape
    G = rows // nsample
    cout = layers[-1][0].shape[1]
    tg = min(tg_target, _round_up(G, 8))
    Gp = _round_up(G, tg)
    if Gp != G:
        x = jnp.pad(x, ((0, (Gp - G) * nsample), (0, 0)))

    flat_args = []
    in_specs = [pl.BlockSpec((tg * nsample, cin), lambda i: (i, 0))]
    for (w, b) in layers:
        ci, co = w.shape
        flat_args += [w, b.reshape(1, co)]
        in_specs += [
            pl.BlockSpec((ci, co), lambda i: (0, 0)),
            pl.BlockSpec((1, co), lambda i: (0, 0)),
        ]

    kernel = functools.partial(_sa1_mlp_max_kernel, num_layers=len(layers), nsample=nsample)
    out = pl.pallas_call(
        kernel,
        out_shape=jax.ShapeDtypeStruct((Gp, cout), out_dtype),
        grid=(Gp // tg,),
        in_specs=in_specs,
        out_specs=pl.BlockSpec((tg, cout), lambda i: (i, 0)),
        compiler_params=pltpu.CompilerParams(
            dimension_semantics=("parallel",),
            vmem_limit_bytes=48 * 1024 * 1024),
    )(x, *flat_args)
    return out[:G] if Gp != G else out


# ----------------------------------------------------------------------------
# PointNet++ glue ops (index-heavy / data-dependent; plain JAX)
# ----------------------------------------------------------------------------
def square_distance(src, dst):
    # src [B, N, C], dst [B, M, C] -> [B, N, M]
    return (
        jnp.sum(src ** 2, -1)[:, :, None]
        + jnp.sum(dst ** 2, -1)[:, None, :]
        - 2.0 * jnp.einsum("bnc,bmc->bnm", src, dst)
    )


def index_points(points, idx):
    # points [B, N, C...], idx [B, ...] -> [B, ..., C...]
    B = points.shape[0]
    batch_idx = jnp.arange(B).reshape((B,) + (1,) * (idx.ndim - 1))
    return points[batch_idx, idx]


def farthest_point_sample(xyz, npoint):
    # TODO(synk): iterative argmax/gather (data-dependent) has no clean Pallas tiling; kept in JAX.
    B, N, _ = xyz.shape

    def body(i, state):
        centroids, distance, farthest = state
        centroids = centroids.at[:, i].set(farthest)
        centroid = jnp.take_along_axis(xyz, farthest[:, None, None], axis=1)  # [B,1,3]
        dist = jnp.sum((xyz - centroid) ** 2, -1)
        distance = jnp.minimum(distance, dist)
        farthest = jnp.argmax(distance, axis=-1).astype(jnp.int32)
        return centroids, distance, farthest

    centroids = jnp.zeros((B, npoint), jnp.int32)
    distance = jnp.full((B, N), 1e10, jnp.float32)
    farthest = jnp.zeros((B,), jnp.int32)  # deterministic start (reference uses randint)
    centroids, _, _ = jax.lax.fori_loop(0, npoint, body, (centroids, distance, farthest))
    return centroids


def query_ball_point(radius, nsample, xyz, new_xyz):
    # Standard PointNet++ ball query.  NOTE: the reference compares sqrdists > radius**2
    # while the module __init__ already passes radius=(12/255)**2; we faithfully match the
    # reference convention (i.e. both squarings).  The first `nsample` indices are picked
    # with top_k instead of a full O(N log N) sort.
    B, N, _ = xyz.shape
    S = new_xyz.shape[1]
    sqrdists = square_distance(new_xyz, xyz)  # [B, S, N]
    group_idx = jnp.broadcast_to(jnp.arange(N, dtype=jnp.int32), (B, S, N))
    group_idx = jnp.where(sqrdists > radius ** 2, N, group_idx)
    group_idx = -jax.lax.top_k(-group_idx, nsample)[0]        # ascending, first nsample
    group_first = group_idx[:, :, :1]
    group_idx = jnp.where(group_idx == N, group_first, group_idx)
    return group_idx


# ----------------------------------------------------------------------------
# Parameters (deterministic, synthetic; BN folded in eval mode)
# ----------------------------------------------------------------------------
def conv_bn_params(key, cin, cout, with_bn=True):
    kw, kb, kg, kbe, km, kv = jax.random.split(key, 6)
    w = 0.1 * jax.random.normal(kw, (cin, cout), jnp.float32)
    conv_b = 0.1 * jax.random.normal(kb, (cout,), jnp.float32)
    if with_bn:
        gamma = 1.0 + 0.1 * jax.random.normal(kg, (cout,), jnp.float32)
        beta = 0.1 * jax.random.normal(kbe, (cout,), jnp.float32)
        mean = 0.1 * jax.random.normal(km, (cout,), jnp.float32)
        var = 1.0 + 0.1 * jnp.abs(jax.random.normal(kv, (cout,), jnp.float32))
        scale = gamma / jnp.sqrt(var + 1e-5)
        bias = beta + (conv_b - mean) * scale
    else:
        scale = jnp.ones((cout,), jnp.float32)
        bias = conv_b
    return w, scale, bias


def init_params(key, embedding_size):
    keys = jax.random.split(key, 8)
    sa_dims = [(3 + 1, 16), (16, 32), (32, 64)]            # sa1 mlp=[16,32,64], in=3+1
    fp_dims = [(64 + 4, 128), (128, 128), (128, 256)]      # fp1 mlp=[128,128,256], in=64+4
    sa1_mlp = [conv_bn_params(keys[i], ci, co) for i, (ci, co) in enumerate(sa_dims)]
    fp1_mlp = [conv_bn_params(keys[3 + i], ci, co) for i, (ci, co) in enumerate(fp_dims)]
    output = conv_bn_params(keys[6], 256, embedding_size, with_bn=True)    # Conv1d + BN1d
    output2 = conv_bn_params(keys[7], embedding_size, embedding_size, with_bn=False)
    return {"sa1_mlp": sa1_mlp, "fp1_mlp": fp1_mlp, "output": output, "output2": output2}


def _fold_bn_layers(layer_list):
    """Fold BN scale into the weights in f32, THEN cast to bf16 for the MXU; keep bias f32."""
    folded = []
    for (w, s, b) in layer_list:
        folded.append(((w * s[None, :]).astype(jnp.bfloat16), b))
    return folded


# ----------------------------------------------------------------------------
# Forward (PointNetEncoder, feat_compute=False)
# ----------------------------------------------------------------------------
def pointnet_encoder_forward(xyz, mask, t_list, params, *, npoint, radius, nsample):
    """xyz/mask: [B, N, 4] (matches the PyTorch forward's (B, N, C) inputs)."""
    del mask, t_list  # unused in the feat_compute == False path (matches reference)
    B, N, _ = xyz.shape
    l0_xyz = xyz[:, :, :3]
    l0_point = xyz[:, :, 3:4]
    l0_point_all = xyz

    # ---- sa1: PointNetSetAbstraction(npoint, radius, nsample, mlp=[16,32,64]) ----
    fps_idx = farthest_point_sample(l0_xyz, npoint)                 # [B, S]
    new_xyz = index_points(l0_xyz, fps_idx)                         # [B, S, 3]
    idx = query_ball_point(radius, nsample, l0_xyz, new_xyz)        # [B, S, ns]
    grouped_xyz = index_points(l0_xyz, idx)                         # [B, S, ns, 3]
    grouped_xyz_norm = grouped_xyz - new_xyz[:, :, None, :]
    grouped_points = index_points(l0_point, idx)                    # [B, S, ns, 1]
    new_points = jnp.concatenate([grouped_xyz_norm, grouped_points], -1)  # [B, S, ns, 4]

    G = B * npoint
    sa1_layers = _fold_bn_layers(params["sa1_mlp"])
    # Fused: Conv2d(1x1)+BN+ReLU x3  +  max over nsample, all in one pallas_call.
    sa1_in = new_points.reshape(G * nsample, 4).astype(jnp.bfloat16)
    l1_feat = sa1_mlp_max(sa1_in, sa1_layers, nsample=nsample, tg_target=256,
                          out_dtype=jnp.bfloat16)                   # [G, 64] bf16
    l1_points = l1_feat.reshape(B, npoint, -1)
    l1_xyz = new_xyz

    # ---- fp1 interpolation (3-NN inverse-distance weights) ----
    # TODO(synk): 3-NN top_k + gather is data-dependent; kept in plain JAX.
    dists = square_distance(l0_xyz, l1_xyz)                         # [B, N, S]
    neg_d3, idx3 = jax.lax.top_k(-dists, 3)                         # 3 nearest (ascending dist)
    d3 = -neg_d3
    dist_recip = 1.0 / (d3 + 1e-8)
    weight = dist_recip / jnp.sum(dist_recip, axis=2, keepdims=True)
    interpolated = jnp.sum(
        index_points(l1_points, idx3).astype(jnp.float32) * weight[..., None], axis=2)  # [B,N,64]

    # ---- fp1 MLP (Conv1d+BN+ReLU x3) fused with the output head in ONE kernel ----
    # No concat: l0_point_all and interpolated go in separately; layer-0 weight is split.
    head_layers = _fold_bn_layers(
        list(params["fp1_mlp"]) + [params["output"], params["output2"]])
    relu_flags = (True, True, True,   # fp1 layers
                  True,               # relu(bn1(output(l0_points)))
                  False)              # output2(x)
    emb = params["output2"][0].shape[1]
    x1 = l0_point_all.reshape(B * N, 4).astype(jnp.bfloat16)
    x2 = interpolated.reshape(B * N, -1).astype(jnp.bfloat16)
    # Output is produced directly in PyTorch's NCL convention [B, emb, N] (lane-dense stores).
    return fp1_head_mlp(x1, x2, head_layers, B=B, N=N, emb=emb,
                        relu_flags=relu_flags, tm_target=2048, out_dtype=jnp.float32)


# ----------------------------------------------------------------------------
if __name__ == "__main__":
    key = jax.random.PRNGKey(0)
    B, N = 2, 64                       # small shapes (module defaults 4096 pts, npoint 2048)
    embedding_size = 32
    npoint, radius, nsample = 16, (12 / 255.0) ** 2, 8

    k_xyz, k_mask, k_t, k_params = jax.random.split(key, 4)
    xyz = jax.random.normal(k_xyz, (B, N, 4), jnp.float32)
    mask = jax.random.normal(k_mask, (B, N, 4), jnp.float32)
    t_list = jax.random.normal(k_t, (B,), jnp.float32)

    params = init_params(k_params, embedding_size)

    fwd = jax.jit(functools.partial(
        pointnet_encoder_forward, npoint=npoint, radius=radius, nsample=nsample))
    out = fwd(xyz, mask, t_list, params)
    jax.block_until_ready(out)
    assert out.shape == (B, embedding_size, N), out.shape
    print("KERNEL_OK")
</pallas_src>

<mosaic_0001>
module attributes {stable_mosaic.version = 11 : i64} {
  func.func @_sa1_mlp_max_kernel(%arg0: i32, %arg1: memref<256x4xbf16, #tpu.memory_space<vmem>>, %arg2: memref<4x16xbf16, #tpu.memory_space<vmem>>, %arg3: memref<1x16xf32, #tpu.memory_space<vmem>>, %arg4: memref<16x32xbf16, #tpu.memory_space<vmem>>, %arg5: memref<1x32xf32, #tpu.memory_space<vmem>>, %arg6: memref<32x64xbf16, #tpu.memory_space<vmem>>, %arg7: memref<1x64xf32, #tpu.memory_space<vmem>>, %arg8: memref<32x64xbf16, #tpu.memory_space<vmem>>) attributes {dimension_semantics = [#tpu.dimension_semantics<parallel>], iteration_bounds = array<i64: 1>, scalar_prefetch = 0 : i64, scratch_operands = 0 : i64, tpu.core_type = #tpu.core_type<tc>, window_params = [{transform_indices = @transform_0, window_bounds = array<i64: 256, 4>}, {pipeline_mode = #tpu.pipeline_mode<synchronous>, transform_indices = @transform_1, window_bounds = array<i64: 4, 16>}, {pipeline_mode = #tpu.pipeline_mode<synchronous>, transform_indices = @transform_2, window_bounds = array<i64: 1, 16>}, {pipeline_mode = #tpu.pipeline_mode<synchronous>, transform_indices = @transform_3, window_bounds = array<i64: 16, 32>}, {pipeline_mode = #tpu.pipeline_mode<synchronous>, transform_indices = @transform_4, window_bounds = array<i64: 1, 32>}, {pipeline_mode = #tpu.pipeline_mode<synchronous>, transform_indices = @transform_5, window_bounds = array<i64: 32, 64>}, {pipeline_mode = #tpu.pipeline_mode<synchronous>, transform_indices = @transform_6, window_bounds = array<i64: 1, 64>}, {transform_indices = @transform_7, window_bounds = array<i64: 32, 64>}]} {
    %c0 = arith.constant 0 : index
    %c0_0 = arith.constant 0 : index
    %0 = vector.load %arg1[%c0, %c0_0] : memref<256x4xbf16, #tpu.memory_space<vmem>>, vector<256x4xbf16>
    %c0_1 = arith.constant 0 : index
    %c0_2 = arith.constant 0 : index
    %1 = vector.load %arg2[%c0_1, %c0_2] : memref<4x16xbf16, #tpu.memory_space<vmem>>, vector<4x16xbf16>
    %c0_3 = arith.constant 0 : index
    %c0_4 = arith.constant 0 : index
    %2 = vector.load %arg3[%c0_3, %c0_4] : memref<1x16xf32, #tpu.memory_space<vmem>>, vector<1x16xf32>
    %cst = arith.constant dense<0.000000e+00> : vector<256x16xf32>
    %3 = tpu.matmul %0, %1, %cst {dimension_numbers = #tpu.dot_dimension_numbers<[1], [0], [0], [1], [0, 0, 1, 1], [], []>} : vector<256x4xbf16>, vector<4x16xbf16>, vector<256x16xf32> -> vector<256x16xf32>
    %4 = vector.broadcast %2 : vector<1x16xf32> to vector<256x16xf32>
    %5 = arith.addf %3, %4 : vector<256x16xf32>
    %cst_5 = arith.constant 0.000000e+00 : f32
    %6 = vector.broadcast %cst_5 : f32 to vector<256x16xf32>
    %7 = arith.maximumf %5, %6 : vector<256x16xf32>
    %8 = arith.truncf %7 : vector<256x16xf32> to vector<256x16xbf16>
    %c0_6 = arith.constant 0 : index
    %c0_7 = arith.constant 0 : index
    %9 = vector.load %arg4[%c0_6, %c0_7] : memref<16x32xbf16, #tpu.memory_space<vmem>>, vector<16x32xbf16>
    %c0_8 = arith.constant 0 : index
    %c0_9 = arith.constant 0 : index
    %10 = vector.load %arg5[%c0_8, %c0_9] : memref<1x32xf32, #tpu.memory_space<vmem>>, vector<1x32xf32>
    %cst_10 = arith.constant dense<0.000000e+00> : vector<256x32xf32>
    %11 = tpu.matmul %8, %9, %cst_10 {dimension_numbers = #tpu.dot_dimension_numbers<[1], [0], [0], [1], [0, 0, 1, 1], [], []>} : vector<256x16xbf16>, vector<16x32xbf16>, vector<256x32xf32> -> vector<256x32xf32>
    %12 = vector.broadcast %10 : vector<1x32xf32> to vector<256x32xf32>
    %13 = arith.addf %11, %12 : vector<256x32xf32>
    %cst_11 = arith.constant 0.000000e+00 : f32
    %14 = vector.broadcast %cst_11 : f32 to vector<256x32xf32>
    %15 = arith.maximumf %13, %14 : vector<256x32xf32>
    %16 = arith.truncf %15 : vector<256x32xf32> to vector<256x32xbf16>
    %c0_12 = arith.constant 0 : index
    %c0_13 = arith.constant 0 : index
    %17 = vector.load %arg6[%c0_12, %c0_13] : memref<32x64xbf16, #tpu.memory_space<vmem>>, vector<32x64xbf16>
    %c0_14 = arith.constant 0 : index
    %c0_15 = arith.constant 0 : index
    %18 = vector.load %arg7[%c0_14, %c0_15] : memref<1x64xf32, #tpu.memory_space<vmem>>, vector<1x64xf32>
    %cst_16 = arith.constant dense<0.000000e+00> : vector<256x64xf32>
    %19 = tpu.matmul %16, %17, %cst_16 {dimension_numbers = #tpu.dot_dimension_numbers<[1], [0], [0], [1], [0, 0, 1, 1], [], []>} : vector<256x32xbf16>, vector<32x64xbf16>, vector<256x64xf32> -> vector<256x64xf32>
    %20 = vector.broadcast %18 : vector<1x64xf32> to vector<256x64xf32>
    %21 = arith.addf %19, %20 : vector<256x64xf32>
    %cst_17 = arith.constant 0.000000e+00 : f32
    %22 = vector.broadcast %cst_17 : f32 to vector<256x64xf32>
    %23 = arith.maximumf %21, %22 : vector<256x64xf32>
    %24 = vector.shape_cast %23 : vector<256x64xf32> to vector<32x8x64xf32>
    %cst_18 = arith.constant dense<0xFF800000> : vector<32x64xf32>
    %25 = vector.multi_reduction <maximumf>, %24, %cst_18 [1] : vector<32x8x64xf32> to vector<32x64xf32>
    %26 = arith.truncf %25 : vector<32x64xf32> to vector<32x64xbf16>
    %c0_19 = arith.constant 0 : index
    %c0_20 = arith.constant 0 : index
    %27 = vector.load %arg8[%c0_19, %c0_20] : memref<32x64xbf16, #tpu.memory_space<vmem>>, vector<32x64xbf16>
    tpu.vector_store %arg8[%c0_19, %c0_20], %26 {strides = array<i32>} : memref<32x64xbf16, #tpu.memory_space<vmem>>, vector<32x64xbf16>,
    return
  }
  func.func @transform_0(%arg0: i32) -> (i32, i32) {
    %c0_i32 = arith.constant 0 : i32
    %c0_i32_0 = arith.constant 0 : i32
    return %arg0, %c0_i32 : i32, i32
  }
  func.func @transform_1(%arg0: i32) -> (i32, i32) {
    %c0_i32 = arith.constant 0 : i32
    %c0_i32_0 = arith.constant 0 : i32
    %c0_i32_1 = arith.constant 0 : i32
    return %c0_i32, %c0_i32_0 : i32, i32
  }
  func.func @transform_2(%arg0: i32) -> (i32, i32) {
    %c0_i32 = arith.constant 0 : i32
    %c0_i32_0 = arith.constant 0 : i32
    %c0_i32_1 = arith.constant 0 : i32
    return %c0_i32, %c0_i32_0 : i32, i32
  }
  func.func @transform_3(%arg0: i32) -> (i32, i32) {
    %c0_i32 = arith.constant 0 : i32
    %c0_i32_0 = arith.constant 0 : i32
    %c0_i32_1 = arith.constant 0 : i32
    return %c0_i32, %c0_i32_0 : i32, i32
  }
  func.func @transform_4(%arg0: i32) -> (i32, i32) {
    %c0_i32 = arith.constant 0 : i32
    %c0_i32_0 = arith.constant 0 : i32
    %c0_i32_1 = arith.constant 0 : i32
    return %c0_i32, %c0_i32_0 : i32, i32
  }
  func.func @transform_5(%arg0: i32) -> (i32, i32) {
    %c0_i32 = arith.constant 0 : i32
    %c0_i32_0 = arith.constant 0 : i32
    %c0_i32_1 = arith.constant 0 : i32
    return %c0_i32, %c0_i32_0 : i32, i32
  }
  func.func @transform_6(%arg0: i32) -> (i32, i32) {
    %c0_i32 = arith.constant 0 : i32
    %c0_i32_0 = arith.constant 0 : i32
    %c0_i32_1 = arith.constant 0 : i32
    return %c0_i32, %c0_i32_0 : i32, i32
  }
  func.func @transform_7(%arg0: i32) -> (i32, i32) {
    %c0_i32 = arith.constant 0 : i32
    %c0_i32_0 = arith.constant 0 : i32
    return %arg0, %c0_i32 : i32, i32
  }
}

module attributes {stable_mosaic.version = 11 : i64} {
  func.func @_fp1_head_kernel(%arg0: i32, %arg1: i32, %arg2: memref<64x4xbf16, #tpu.memory_space<vmem>>, %arg3: memref<64x64xbf16, #tpu.memory_space<vmem>>, %arg4: memref<4x128xbf16, #tpu.memory_space<vmem>>, %arg5: memref<64x128xbf16, #tpu.memory_space<vmem>>, %arg6: memref<1x128xf32, #tpu.memory_space<vmem>>, %arg7: memref<128x128xbf16, #tpu.memory_space<vmem>>, %arg8: memref<1x128xf32, #tpu.memory_space<vmem>>, %arg9: memref<128x256xbf16, #tpu.memory_space<vmem>>, %arg10: memref<1x256xf32, #tpu.memory_space<vmem>>, %arg11: memref<256x32xbf16, #tpu.memory_space<vmem>>, %arg12: memref<1x32xf32, #tpu.memory_space<vmem>>, %arg13: memref<32x32xbf16, #tpu.memory_space<vmem>>, %arg14: memref<1x32xf32, #tpu.memory_space<vmem>>, %arg15: memref<1x32x64xf32, #tpu.memory_space<vmem>>) attributes {dimension_semantics = [#tpu.dimension_semantics<parallel>, #tpu.dimension_semantics<parallel>], iteration_bounds = array<i64: 2, 1>, scalar_prefetch = 0 : i64, scratch_operands = 0 : i64, tpu.core_type = #tpu.core_type<tc>, window_params = [{transform_indices = @transform_0, window_bounds = array<i64: 64, 4>}, {transform_indices = @transform_1, window_bounds = array<i64: 64, 64>}, {pipeline_mode = #tpu.pipeline_mode<synchronous>, transform_indices = @transform_2, window_bounds = array<i64: 4, 128>}, {pipeline_mode = #tpu.pipeline_mode<synchronous>, transform_indices = @transform_3, window_bounds = array<i64: 64, 128>}, {pipeline_mode = #tpu.pipeline_mode<synchronous>, transform_indices = @transform_4, window_bounds = array<i64: 1, 128>}, {pipeline_mode = #tpu.pipeline_mode<synchronous>, transform_indices = @transform_5, window_bounds = array<i64: 128, 128>}, {pipeline_mode = #tpu.pipeline_mode<synchronous>, transform_indices = @transform_6, window_bounds = array<i64: 1, 128>}, {pipeline_mode = #tpu.pipeline_mode<synchronous>, transform_indices = @transform_7, window_bounds = array<i64: 128, 256>}, {pipeline_mode = #tpu.pipeline_mode<synchronous>, transform_indices = @transform_8, window_bounds = array<i64: 1, 256>}, {pipeline_mode = #tpu.pipeline_mode<synchronous>, transform_indices = @transform_9, window_bounds = array<i64: 256, 32>}, {pipeline_mode = #tpu.pipeline_mode<synchronous>, transform_indices = @transform_10, window_bounds = array<i64: 1, 32>}, {pipeline_mode = #tpu.pipeline_mode<synchronous>, transform_indices = @transform_11, window_bounds = array<i64: 32, 32>}, {pipeline_mode = #tpu.pipeline_mode<synchronous>, transform_indices = @transform_12, window_bounds = array<i64: 1, 32>}, {transform_indices = @transform_13, window_bounds = array<i64: 1, 32, 64>}]} {
    %c0 = arith.constant 0 : index
    %c0_0 = arith.constant 0 : index
    %0 = vector.load %arg4[%c0, %c0_0] : memref<4x128xbf16, #tpu.memory_space<vmem>>, vector<4x128xbf16>
    %c0_1 = arith.constant 0 : index
    %c0_2 = arith.constant 0 : index
    %1 = vector.load %arg5[%c0_1, %c0_2] : memref<64x128xbf16, #tpu.memory_space<vmem>>, vector<64x128xbf16>
    %c0_3 = arith.constant 0 : index
    %c0_4 = arith.constant 0 : index
    %2 = vector.load %arg6[%c0_3, %c0_4] : memref<1x128xf32, #tpu.memory_space<vmem>>, vector<1x128xf32>
    %c0_5 = arith.constant 0 : index
    %c0_6 = arith.constant 0 : index
    %3 = vector.load %arg2[%c0_5, %c0_6] : memref<64x4xbf16, #tpu.memory_space<vmem>>, vector<64x4xbf16>
    %cst = arith.constant dense<0.000000e+00> : vector<64x128xf32>
    %4 = tpu.matmul %3, %0, %cst {dimension_numbers = #tpu.dot_dimension_numbers<[1], [0], [0], [1], [0, 0, 1, 1], [], []>} : vector<64x4xbf16>, vector<4x128xbf16>, vector<64x128xf32> -> vector<64x128xf32>
    %c0_7 = arith.constant 0 : index
    %c0_8 = arith.constant 0 : index
    %5 = vector.load %arg3[%c0_7, %c0_8] : memref<64x64xbf16, #tpu.memory_space<vmem>>, vector<64x64xbf16>
    %cst_9 = arith.constant dense<0.000000e+00> : vector<64x128xf32>
    %6 = tpu.matmul %5, %1, %cst_9 {dimension_numbers = #tpu.dot_dimension_numbers<[1], [0], [0], [1], [0, 0, 1, 1], [], []>} : vector<64x64xbf16>, vector<64x128xbf16>, vector<64x128xf32> -> vector<64x128xf32>
    %7 = arith.addf %4, %6 : vector<64x128xf32>
    %8 = vector.broadcast %2 : vector<1x128xf32> to vector<64x128xf32>
    %9 = arith.addf %7, %8 : vector<64x128xf32>
    %cst_10 = arith.constant 0.000000e+00 : f32
    %10 = vector.broadcast %cst_10 : f32 to vector<64x128xf32>
    %11 = arith.maximumf %9, %10 : vector<64x128xf32>
    %12 = arith.truncf %11 : vector<64x128xf32> to vector<64x128xbf16>
    %c0_11 = arith.constant 0 : index
    %c0_12 = arith.constant 0 : index
    %13 = vector.load %arg7[%c0_11, %c0_12] : memref<128x128xbf16, #tpu.memory_space<vmem>>, vector<128x128xbf16>
    %c0_13 = arith.constant 0 : index
    %c0_14 = arith.constant 0 : index
    %14 = vector.load %arg8[%c0_13, %c0_14] : memref<1x128xf32, #tpu.memory_space<vmem>>, vector<1x128xf32>
    %cst_15 = arith.constant dense<0.000000e+00> : vector<64x128xf32>
    %15 = tpu.matmul %12, %13, %cst_15 {dimension_numbers = #tpu.dot_dimension_numbers<[1], [0], [0], [1], [0, 0, 1, 1], [], []>} : vector<64x128xbf16>, vector<128x128xbf16>, vector<64x128xf32> -> vector<64x128xf32>
    %16 = vector.broadcast %14 : vector<1x128xf32> to vector<64x128xf32>
    %17 = arith.addf %15, %16 : vector<64x128xf32>
    %cst_16 = arith.constant 0.000000e+00 : f32
    %18 = vector.broadcast %cst_16 : f32 to vector<64x128xf32>
    %19 = arith.maximumf %17, %18 : vector<64x128xf32>
    %20 = arith.truncf %19 : vector<64x128xf32> to vector<64x128xbf16>
    %c0_17 = arith.constant 0 : index
    %c0_18 = arith.constant 0 : index
    %21 = vector.load %arg9[%c0_17, %c0_18] : memref<128x256xbf16, #tpu.memory_space<vmem>>, vector<128x256xbf16>
    %c0_19 = arith.constant 0 : index
    %c0_20 = arith.constant 0 : index
    %22 = vector.load %arg10[%c0_19, %c0_20] : memref<1x256xf32, #tpu.memory_space<vmem>>, vector<1x256xf32>
    %cst_21 = arith.constant dense<0.000000e+00> : vector<64x256xf32>
    %23 = tpu.matmul %20, %21, %cst_21 {dimension_numbers = #tpu.dot_dimension_numbers<[1], [0], [0], [1], [0, 0, 1, 1], [], []>} : vector<64x128xbf16>, vector<128x256xbf16>, vector<64x256xf32> -> vector<64x256xf32>
    %24 = vector.broadcast %22 : vector<1x256xf32> to vector<64x256xf32>
    %25 = arith.addf %23, %24 : vector<64x256xf32>
    %cst_22 = arith.constant 0.000000e+00 : f32
    %26 = vector.broadcast %cst_22 : f32 to vector<64x256xf32>
    %27 = arith.maximumf %25, %26 : vector<64x256xf32>
    %28 = arith.truncf %27 : vector<64x256xf32> to vector<64x256xbf16>
    %c0_23 = arith.constant 0 : index
    %c0_24 = arith.constant 0 : index
    %29 = vector.load %arg11[%c0_23, %c0_24] : memref<256x32xbf16, #tpu.memory_space<vmem>>, vector<256x32xbf16>
    %c0_25 = arith.constant 0 : index
    %c0_26 = arith.constant 0 : index
    %30 = vector.load %arg12[%c0_25, %c0_26] : memref<1x32xf32, #tpu.memory_space<vmem>>, vector<1x32xf32>
    %cst_27 = arith.constant dense<0.000000e+00> : vector<64x32xf32>
    %31 = tpu.matmul %28, %29, %cst_27 {dimension_numbers = #tpu.dot_dimension_numbers<[1], [0], [0], [1], [0, 0, 1, 1], [], []>} : vector<64x256xbf16>, vector<256x32xbf16>, vector<64x32xf32> -> vector<64x32xf32>
    %32 = vector.broadcast %30 : vector<1x32xf32> to vector<64x32xf32>
    %33 = arith.addf %31, %32 : vector<64x32xf32>
    %cst_28 = arith.constant 0.000000e+00 : f32
    %34 = vector.broadcast %cst_28 : f32 to vector<64x32xf32>
    %35 = arith.maximumf %33, %34 : vector<64x32xf32>
    %36 = arith.truncf %35 : vector<64x32xf32> to vector<64x32xbf16>
    %c0_29 = arith.constant 0 : index
    %c0_30 = arith.constant 0 : index
    %37 = vector.load %arg13[%c0_29, %c0_30] : memref<32x32xbf16, #tpu.memory_space<vmem>>, vector<32x32xbf16>
    %c0_31 = arith.constant 0 : index
    %c0_32 = arith.constant 0 : index
    %38 = vector.load %arg14[%c0_31, %c0_32] : memref<1x32xf32, #tpu.memory_space<vmem>>, vector<1x32xf32>
    %cst_33 = arith.constant dense<0.000000e+00> : vector<64x32xf32>
    %39 = tpu.matmul %36, %37, %cst_33 {dimension_numbers = #tpu.dot_dimension_numbers<[1], [0], [0], [1], [0, 0, 1, 1], [], []>} : vector<64x32xbf16>, vector<32x32xbf16>, vector<64x32xf32> -> vector<64x32xf32>
    %40 = vector.broadcast %38 : vector<1x32xf32> to vector<64x32xf32>
    %41 = arith.addf %39, %40 : vector<64x32xf32>
    %42 = tpu.transpose %41, [1, 0] : vector<64x32xf32> -> vector<32x64xf32>
    %43 = vector.shape_cast %42 : vector<32x64xf32> to vector<1x32x64xf32>
    %c0_34 = arith.constant 0 : index
    %c0_35 = arith.constant 0 : index
    %c0_36 = arith.constant 0 : index
    %44 = vector.load %arg15[%c0_34, %c0_35, %c0_36] : memref<1x32x64xf32, #tpu.memory_space<vmem>>, vector<1x32x64xf32>
    tpu.vector_store %arg15[%c0_34, %c0_35, %c0_36], %43 {strides = array<i32>} : memref<1x32x64xf32, #tpu.memory_space<vmem>>, vector<1x32x64xf32>,
    return
  }
  func.func @transform_0(%arg0: i32, %arg1: i32) -> (i32, i32) {
    %c1_i32 = arith.constant 1 : i32
    %0 = arith.muli %arg0, %c1_i32 : i32
    %1 = arith.addi %0, %arg1 : i32
    %c0_i32 = arith.constant 0 : i32
    %c0_i32_0 = arith.constant 0 : i32
    return %1, %c0_i32 : i32, i32
  }
  func.func @transform_1(%arg0: i32, %arg1: i32) -> (i32, i32) {
    %c1_i32 = arith.constant 1 : i32
    %0 = arith.muli %arg0, %c1_i32 : i32
    %1 = arith.addi %0, %arg1 : i32
    %c0_i32 = arith.constant 0 : i32
    %c0_i32_0 = arith.constant 0 : i32
    return %1, %c0_i32 : i32, i32
  }
  func.func @transform_2(%arg0: i32, %arg1: i32) -> (i32, i32) {
    %c0_i32 = arith.constant 0 : i32
    %c0_i32_0 = arith.constant 0 : i32
    %c0_i32_1 = arith.constant 0 : i32
    return %c0_i32, %c0_i32_0 : i32, i32
  }
  func.func @transform_3(%arg0: i32, %arg1: i32) -> (i32, i32) {
    %c0_i32 = arith.constant 0 : i32
    %c0_i32_0 = arith.constant 0 : i32
    %c0_i32_1 = arith.constant 0 : i32
    return %c0_i32, %c0_i32_0 : i32, i32
  }
  func.func @transform_4(%arg0: i32, %arg1: i32) -> (i32, i32) {
    %c0_i32 = arith.constant 0 : i32
    %c0_i32_0 = arith.constant 0 : i32
    %c0_i32_1 = arith.constant 0 : i32
    return %c0_i32, %c0_i32_0 : i32, i32
  }
  func.func @transform_5(%arg0: i32, %arg1: i32) -> (i32, i32) {
    %c0_i32 = arith.constant 0 : i32
    %c0_i32_0 = arith.constant 0 : i32
    %c0_i32_1 = arith.constant 0 : i32
    return %c0_i32, %c0_i32_0 : i32, i32
  }
  func.func @transform_6(%arg0: i32, %arg1: i32) -> (i32, i32) {
    %c0_i32 = arith.constant 0 : i32
    %c0_i32_0 = arith.constant 0 : i32
    %c0_i32_1 = arith.constant 0 : i32
    return %c0_i32, %c0_i32_0 : i32, i32
  }
  func.func @transform_7(%arg0: i32, %arg1: i32) -> (i32, i32) {
    %c0_i32 = arith.constant 0 : i32
    %c0_i32_0 = arith.constant 0 : i32
    %c0_i32_1 = arith.constant 0 : i32
    return %c0_i32, %c0_i32_0 : i32, i32
  }
  func.func @transform_8(%arg0: i32, %arg1: i32) -> (i32, i32) {
    %c0_i32 = arith.constant 0 : i32
    %c0_i32_0 = arith.constant 0 : i32
    %c0_i32_1 = arith.constant 0 : i32
    return %c0_i32, %c0_i32_0 : i32, i32
  }
  func.func @transform_9(%arg0: i32, %arg1: i32) -> (i32, i32) {
    %c0_i32 = arith.constant 0 : i32
    %c0_i32_0 = arith.constant 0 : i32
    %c0_i32_1 = arith.constant 0 : i32
    return %c0_i32, %c0_i32_0 : i32, i32
  }
  func.func @transform_10(%arg0: i32, %arg1: i32) -> (i32, i32) {
    %c0_i32 = arith.constant 0 : i32
    %c0_i32_0 = arith.constant 0 : i32
    %c0_i32_1 = arith.constant 0 : i32
    return %c0_i32, %c0_i32_0 : i32, i32
  }
  func.func @transform_11(%arg0: i32, %arg1: i32) -> (i32, i32) {
    %c0_i32 = arith.constant 0 : i32
    %c0_i32_0 = arith.constant 0 : i32
    %c0_i32_1 = arith.constant 0 : i32
    return %c0_i32, %c0_i32_0 : i32, i32
  }
  func.func @transform_12(%arg0: i32, %arg1: i32) -> (i32, i32) {
    %c0_i32 = arith.constant 0 : i32
    %c0_i32_0 = arith.constant 0 : i32
    %c0_i32_1 = arith.constant 0 : i32
    return %c0_i32, %c0_i32_0 : i32, i32
  }
  func.func @transform_13(%arg0: i32, %arg1: i32) -> (i32, i32, i32) {
    %c0_i32 = arith.constant 0 : i32
    %c0_i32_0 = arith.constant 0 : i32
    return %arg0, %c0_i32, %arg1 : i32, i32, i32
  }
}

</mosaic_0001>

<llo_original>
// kernel: custom-call.10
$region0: #{custom-call.10}
  %s0 = inlined_call_operand.vmem [shape: f32[2,64], index: 0, kind: output, shape index: {}]

// kernel: pointnet_encoder_forward.2
$region0: #{pointnet_encoder_forward.2}
  #allocation0 [shape = 'u32[]', space=smem, size = 0x4, offset = 0x4, fixed_abs, tag = 'smem constant byte address 0x4 - core index']
  #allocation1 [shape = 'u32[144,128]{1,0:T(1,128)}', space=vmem, size = 0x12000, scoped, tag = 'internal scratch']
  %s0 = inlined_call_operand.vmem [shape: bf16[256,4], index: 0, kind: input, shape index: {}]
  %s1 = inlined_call_operand.vmem [shape: bf16[4,16], index: 1, kind: input, shape index: {}]
  %s2 = inlined_call_operand.vmem [shape: f32[1,16], index: 2, kind: input, shape index: {}]
  %s3 = inlined_call_operand.vmem [shape: bf16[16,32], index: 3, kind: input, shape index: {}]
  %s4 = inlined_call_operand.vmem [shape: f32[1,32], index: 4, kind: input, shape index: {}]
  %s5 = inlined_call_operand.vmem [shape: bf16[32,64], index: 5, kind: input, shape index: {}]
  %s6 = inlined_call_operand.vmem [shape: f32[1,64], index: 6, kind: input, shape index: {}]
  %s7 = inlined_call_operand.vmem [shape: bf16[32,64], index: 7, kind: output, shape index: {}]
  %s8 = sld [smem:[#allocation0]]
  $region38: #{pointnet_encoder_forward.2} parent=0
    _
  %s10 = ssub.s32 1, %s8
  %s11 = scalar_select 0, %s10, %s8
  // Predicated region
  $region2: #{pointnet_encoder_forward.2} parent=0 // pred_check
    _
  $region3: #{pointnet_encoder_forward.2} parent=0 // pred_check_branch
    %13 = sbr.rel (0) target = $region5
  $region4: #{pointnet_encoder_forward.2} parent=0 // pred_region
    _
  $region5: #{pointnet_encoder_forward.2} parent=0 // pred_fallthru
    _
  // Predicated region
  $region6: #{pointnet_encoder_forward.2} parent=0 // pred_check
    _
  $region7: #{pointnet_encoder_forward.2} parent=0 // pred_check_branch
    %15 = sbr.rel (0) target = $region9
  $region8: #{pointnet_encoder_forward.2} parent=0 // pred_region
    _
  $region9: #{pointnet_encoder_forward.2} parent=0 // pred_fallthru
    _
  // Predicated region
  $region10: #{pointnet_encoder_forward.2} parent=0 // pred_check
    _
  $region11: #{pointnet_encoder_forward.2} parent=0 // pred_check_branch
    %17 = sbr.rel (0) target = $region13
  $region12: #{pointnet_encoder_forward.2} parent=0 // pred_region
    _
  $region13: #{pointnet_encoder_forward.2} parent=0 // pred_fallthru
    _
  // Predicated region
  $region14: #{pointnet_encoder_forward.2} parent=0 // pred_check
    _
  $region15: #{pointnet_encoder_forward.2} parent=0 // pred_check_branch
    %19 = sbr.rel (0) target = $region17
  $region16: #{pointnet_encoder_forward.2} parent=0 // pred_region
    _
  $region17: #{pointnet_encoder_forward.2} parent=0 // pred_fallthru
    _
  // Predicated region
  $region18: #{pointnet_encoder_forward.2} parent=0 // pred_check
    _
  $region19: #{pointnet_encoder_forward.2} parent=0 // pred_check_branch
    %21 = sbr.rel (0) target = $region21
  $region20: #{pointnet_encoder_forward.2} parent=0 // pred_region
    _
  $region21: #{pointnet_encoder_forward.2} parent=0 // pred_fallthru
    _
  // Predicated region
  $region22: #{pointnet_encoder_forward.2} parent=0 // pred_check
    _
  $region23: #{pointnet_encoder_forward.2} parent=0 // pred_check_branch
    %23 = sbr.rel (0) target = $region25
  $region24: #{pointnet_encoder_forward.2} parent=0 // pred_region
    _
  $region25: #{pointnet_encoder_forward.2} parent=0 // pred_fallthru
    _
  // Predicated region
  $region26: #{pointnet_encoder_forward.2} parent=0 // pred_check
    _
  $region27: #{pointnet_encoder_forward.2} parent=0 // pred_check_branch
    %25 = sbr.rel (0) target = $region29
  $region28: #{pointnet_encoder_forward.2} parent=0 // pred_region
    _
  $region29: #{pointnet_encoder_forward.2} parent=0 // pred_fallthru
    _
  %v27 = vld [vmem:[%s0] sm:$0xf]
  %v28 = vld [vmem:[%s0 + $0x4] sm:$0xf]
  %v29 = vld [vmem:[%s0 + $0x8] sm:$0xf]
  %v30 = vld [vmem:[%s0 + $0xc] sm:$0xf]
  %v31 = vld [vmem:[%s0 + $0x10] sm:$0xf]
  %v32 = vld [vmem:[%s0 + $0x14] sm:$0xf]
  %v33 = vld [vmem:[%s0 + $0x18] sm:$0xf]
  %v34 = vld [vmem:[%s0 + $0x1c] sm:$0xf]
  %v35 = vld [vmem:[%s0 + $0x20] sm:$0xf]
  %v36 = vld [vmem:[%s0 + $0x24] sm:$0xf]
  %v37 = vld [vmem:[%s0 + $0x28] sm:$0xf]
  %v38 = vld [vmem:[%s0 + $0x2c] sm:$0xf]
  %v39 = vld [vmem:[%s0 + $0x30] sm:$0xf]
  %v40 = vld [vmem:[%s0 + $0x34] sm:$0xf]
  %v41 = vld [vmem:[%s0 + $0x38] sm:$0xf]
  %v42 = vld [vmem:[%s0 + $0x3c] sm:$0xf]
  %v43 = vld [vmem:[%s0 + $0x40] sm:$0xf]
  %v44 = vld [vmem:[%s0 + $0x44] sm:$0xf]
  %v45 = vld [vmem:[%s0 + $0x48] sm:$0xf]
  %v46 = vld [vmem:[%s0 + $0x4c] sm:$0xf]
  %v47 = vld [vmem:[%s0 + $0x50] sm:$0xf]
  %v48 = vld [vmem:[%s0 + $0x54] sm:$0xf]
  %v49 = vld [vmem:[%s0 + $0x58] sm:$0xf]
  %v50 = vld [vmem:[%s0 + $0x5c] sm:$0xf]
  %v51 = vld [vmem:[%s0 + $0x60] sm:$0xf]
  %v52 = vld [vmem:[%s0 + $0x64] sm:$0xf]
  %v53 = vld [vmem:[%s0 + $0x68] sm:$0xf]
  %v54 = vld [vmem:[%s0 + $0x6c] sm:$0xf]
  %v55 = vld [vmem:[%s0 + $0x70] sm:$0xf]
  %v56 = vld [vmem:[%s0 + $0x74] sm:$0xf]
  %v57 = vld [vmem:[%s0 + $0x78] sm:$0xf]
  %v58 = vld [vmem:[%s0 + $0x7c] sm:$0xf]
  %v59 = vld [vmem:[%s1] sm:$0x3]
  %v60 = vld [vmem:[%s2] sm:$0x1]
  %v62 = vlaneseq
  %v63 = vshrl.u32 %v62, 7
  %v64 = vsub.s32 0, %v63
  %v65 = vrot.slane %v60, %v64
  %v99 = vunpack.c.l.b16 %v27
  %v100 = vunpack.c.l.b16 %v28
  %v101 = vunpack.c.l.b16 %v29
  %v102 = vunpack.c.l.b16 %v30
  %v103 = vunpack.c.l.b16 %v31
  %v104 = vunpack.c.l.b16 %v32
  %v105 = vunpack.c.l.b16 %v33
  %v106 = vunpack.c.l.b16 %v34
  %v107 = vunpack.c.l.b16 %v35
  %v108 = vunpack.c.l.b16 %v36
  %v109 = vunpack.c.l.b16 %v37
  %v110 = vunpack.c.l.b16 %v38
  %v111 = vunpack.c.l.b16 %v39
  %v112 = vunpack.c.l.b16 %v40
  %v113 = vunpack.c.l.b16 %v41
  %v114 = vunpack.c.l.b16 %v42
  %v115 = vunpack.c.l.b16 %v43
  %v116 = vunpack.c.l.b16 %v44
  %v117 = vunpack.c.l.b16 %v45
  %v118 = vunpack.c.l.b16 %v46
  %v119 = vunpack.c.l.b16 %v47
  %v120 = vunpack.c.l.b16 %v48
  %v121 = vunpack.c.l.b16 %v49
  %v122 = vunpack.c.l.b16 %v50
  %v123 = vunpack.c.l.b16 %v51
  %v124 = vunpack.c.l.b16 %v52
  %v125 = vunpack.c.l.b16 %v53
  %v126 = vunpack.c.l.b16 %v54
  %v127 = vunpack.c.l.b16 %v55
  %v128 = vunpack.c.l.b16 %v56
  %v129 = vunpack.c.l.b16 %v57
  %v130 = vunpack.c.l.b16 %v58
  %v131 = vpack.c.b16 %v100, %v99
  %v132 = vpack.c.b16 %v102, %v101
  %v133 = vpack.c.b16 %v104, %v103
  %v134 = vpack.c.b16 %v106, %v105
  %v135 = vpack.c.b16 %v108, %v107
  %v136 = vpack.c.b16 %v110, %v109
  %v137 = vpack.c.b16 %v112, %v111
  %v138 = vpack.c.b16 %v114, %v113
  %v139 = vpack.c.b16 %v116, %v115
  %v140 = vpack.c.b16 %v118, %v117
  %v141 = vpack.c.b16 %v120, %v119
  %v142 = vpack.c.b16 %v122, %v121
  %v143 = vpack.c.b16 %v124, %v123
  %v144 = vpack.c.b16 %v126, %v125
  %v145 = vpack.c.b16 %v128, %v127
  %v146 = vpack.c.b16 %v130, %v129
  %vm147 = vcmask 31744
  %v149 = vsel %vm147, %v131, 0
  %v152 = vsel %vm147, %v132, 0
  %v155 = vsel %vm147, %v133, 0
  %v158 = vsel %vm147, %v134, 0
  %v161 = vsel %vm147, %v135, 0
  %v164 = vsel %vm147, %v136, 0
  %v167 = vsel %vm147, %v137, 0
  %v170 = vsel %vm147, %v138, 0
  %v173 = vsel %vm147, %v139, 0
  %v176 = vsel %vm147, %v140, 0
  %v179 = vsel %vm147, %v141, 0
  %v182 = vsel %vm147, %v142, 0
  %v185 = vsel %vm147, %v143, 0
  %v188 = vsel %vm147, %v144, 0
  %v191 = vsel %vm147, %v145, 0
  %v194 = vsel %vm147, %v146, 0
  %vm196 = vcmask 1041408
  %v198 = vsel %vm196, %v59, 0
  %200 = vmatprep.subr.bf16.mxu0 0
  %201 = vmatpush1.bf16.msra.mxu0 %v198
  %202 = vmatprep.subr.bf16.mxu0 0
  %203 = vmatpush1.bf16.msra.mxu0 0
  %204 = vmatprep.subr.bf16.mxu0 0
  %205 = vmatpush1.bf16.msra.mxu0 0
  %206 = vmatprep.subr.bf16.mxu0 0
  %207 = vmatpush1.bf16.msra.mxu0 0
  %208 = vmatprep.subr.bf16.mxu0 0
  %209 = vmatpush1.bf16.msra.mxu0 0
  %210 = vmatprep.subr.bf16.mxu0 0
  %211 = vmatpush1.bf16.msra.mxu0 0
  %212 = vmatprep.subr.bf16.mxu0 0
  %213 = vmatpush1.bf16.msra.mxu0 0
  %214 = vmatprep.subr.bf16.mxu0 0
  %215 = vmatpush1.bf16.msra.mxu0 0
  %216 = vmatprep.subr.bf16.mxu0 0
  %217 = vmatpush1.bf16.msra.mxu0 0
  %218 = vmatprep.subr.bf16.mxu0 0
  %219 = vmatpush1.bf16.msra.mxu0 0
  %220 = vmatprep.subr.bf16.mxu0 0
  %221 = vmatpush1.bf16.msra.mxu0 0
  %222 = vmatprep.subr.bf16.mxu0 0
  %223 = vmatpush1.bf16.msra.mxu0 0
  %224 = vmatprep.subr.bf16.mxu0 0
  %225 = vmatpush1.bf16.msra.mxu0 0
  %226 = vmatprep.subr.bf16.mxu0 0
  %227 = vmatpush1.bf16.msra.mxu0 0
  %228 = vmatprep.subr.bf16.mxu0 0
  %229 = vmatpush1.bf16.msra.mxu0 0
  %230 = vmatprep.subr.bf16.mxu0 0
  %231 = vmatpush1.bf16.msra.mxu0 0
  %232 = vmatprep.mubr.bf16.mxu0 0
  %233 = vmatmul.mubr.bf16.gmra.mrb[0].mxu0 %v149
  %v234 = vpop.f32.mrb[0].mxu0
  %v235 = vadd.f32 %v65, %v234
  %v236 = vpop.f32.mrb[0].mxu0
  %v237 = vpop.f32.mrb[0].mxu0
  %v238 = vadd.f32 %v65, %v237
  %v239 = vpop.f32.mrb[0].mxu0
  %240 = vmatprep.mubr.bf16.mxu0 0
  %241 = vmatmul.mubr.bf16.gmra.mrb[0].mxu0 %v152
  %v242 = vpop.f32.mrb[0].mxu0
  %v243 = vadd.f32 %v65, %v242
  %v244 = vpop.f32.mrb[0].mxu0
  %v245 = vpop.f32.mrb[0].mxu0
  %v246 = vadd.f32 %v65, %v245
  %v247 = vpop.f32.mrb[0].mxu0
  %248 = vmatprep.mubr.bf16.mxu0 0
  %249 = vmatmul.mubr.bf16.gmra.mrb[0].mxu0 %v155
  %v250 = vpop.f32.mrb[0].mxu0
  %v251 = vadd.f32 %v65, %v250
  %v252 = vpop.f32.mrb[0].mxu0
  %v253 = vpop.f32.mrb[0].mxu0
  %v254 = vadd.f32 %v65, %v253
  %v255 = vpop.f32.mrb[0].mxu0
  %256 = vmatprep.mubr.bf16.mxu0 0
  %257 = vmatmul.mubr.bf16.gmra.mrb[0].mxu0 %v158
  %v258 = vpop.f32.mrb[0].mxu0
  %v259 = vadd.f32 %v65, %v258
  %v260 = vpop.f32.mrb[0].mxu0
  %v261 = vpop.f32.mrb[0].mxu0
  %v262 = vadd.f32 %v65, %v261
  %v263 = vpop.f32.mrb[0].mxu0
  %264 = vmatprep.mubr.bf16.mxu0 0
  %265 = vmatmul.mubr.bf16.gmra.mrb[0].mxu0 %v161
  %v266 = vpop.f32.mrb[0].mxu0
  %v267 = vadd.f32 %v65, %v266
  %v268 = vpop.f32.mrb[0].mxu0
  %v269 = vpop.f32.mrb[0].mxu0
  %v270 = vadd.f32 %v65, %v269
  %v271 = vpop.f32.mrb[0].mxu0
  %272 = vmatprep.mubr.bf16.mxu0 0
  %273 = vmatmul.mubr.bf16.gmra.mrb[0].mxu0 %v164
  %v274 = vpop.f32.mrb[0].mxu0
  %v275 = vadd.f32 %v65, %v274
  %v276 = vpop.f32.mrb[0].mxu0
  %v277 = vpop.f32.mrb[0].mxu0
  %v278 = vadd.f32 %v65, %v277
  %v279 = vpop.f32.mrb[0].mxu0
  %280 = vmatprep.mubr.bf16.mxu0 0
  %281 = vmatmul.mubr.bf16.gmra.mrb[0].mxu0 %v167
  %v282 = vpop.f32.mrb[0].mxu0
  %v283 = vadd.f32 %v65, %v282
  %v284 = vpop.f32.mrb[0].mxu0
  %v285 = vpop.f32.mrb[0].mxu0
  %v286 = vadd.f32 %v65, %v285
  %v287 = vpop.f32.mrb[0].mxu0
  %288 = vmatprep.mubr.bf16.mxu0 0
  %289 = vmatmul.mubr.bf16.gmra.mrb[0].mxu0 %v170
  %v290 = vpop.f32.mrb[0].mxu0
  %v291 = vadd.f32 %v65, %v290
  %v292 = vpop.f32.mrb[0].mxu0
  %v293 = vpop.f32.mrb[0].mxu0
  %v294 = vadd.f32 %v65, %v293
  %v295 = vpop.f32.mrb[0].mxu0
  %296 = vmatprep.mubr.bf16.mxu0 0
  %297 = vmatmul.mubr.bf16.gmra.mrb[0].mxu0 %v173
  %v298 = vpop.f32.mrb[0].mxu0
  %v299 = vadd.f32 %v65, %v298
  %v300 = vpop.f32.mrb[0].mxu0
  %v301 = vpop.f32.mrb[0].mxu0
  %v302 = vadd.f32 %v65, %v301
  %v303 = vpop.f32.mrb[0].mxu0
  %304 = vmatprep.mubr.bf16.mxu0 0
  %305 = vmatmul.mubr.bf16.gmra.mrb[0].mxu0 %v176
  %v306 = vpop.f32.mrb[0].mxu0
  %v307 = vadd.f32 %v65, %v306
  %v308 = vpop.f32.mrb[0].mxu0
  %v309 = vpop.f32.mrb[0].mxu0
  %v310 = vadd.f32 %v65, %v309
  %v311 = vpop.f32.mrb[0].mxu0
  %312 = vmatprep.mubr.bf16.mxu0 0
  %313 = vmatmul.mubr.bf16.gmra.mrb[0].mxu0 %v179
  %v314 = vpop.f32.mrb[0].mxu0
  %v315 = vadd.f32 %v65, %v314
  %v316 = vpop.f32.mrb[0].mxu0
  %v317 = vpop.f32.mrb[0].mxu0
  %v318 = vadd.f32 %v65, %v317
  %v319 = vpop.f32.mrb[0].mxu0
  %320 = vmatprep.mubr.bf16.mxu0 0
  %321 = vmatmul.mubr.bf16.gmra.mrb[0].mxu0 %v182
  %v322 = vpop.f32.mrb[0].mxu0
  %v323 = vadd.f32 %v65, %v322
  %v324 = vpop.f32.mrb[0].mxu0
  %v325 = vpop.f32.mrb[0].mxu0
  %v326 = vadd.f32 %v65, %v325
  %v327 = vpop.f32.mrb[0].mxu0
  %328 = vmatprep.mubr.bf16.mxu0 0
  %329 = vmatmul.mubr.bf16.gmra.mrb[0].mxu0 %v185
  %v330 = vpop.f32.mrb[0].mxu0
  %v331 = vadd.f32 %v65, %v330
  %v332 = vpop.f32.mrb[0].mxu0
  %v333 = vpop.f32.mrb[0].mxu0
  %v334 = vadd.f32 %v65, %v333
  %v335 = vpop.f32.mrb[0].mxu0
  %336 = vmatprep.mubr.bf16.mxu0 0
  %337 = vmatmul.mubr.bf16.gmra.mrb[0].mxu0 %v188
  %v338 = vpop.f32.mrb[0].mxu0
  %v339 = vadd.f32 %v65, %v338
  %v340 = vpop.f32.mrb[0].mxu0
  %v341 = vpop.f32.mrb[0].mxu0
  %v342 = vadd.f32 %v65, %v341
  %v343 = vpop.f32.mrb[0].mxu0
  %344 = vmatprep.mubr.bf16.mxu0 0
  %345 = vmatmul.mubr.bf16.gmra.mrb[0].mxu0 %v191
  %v346 = vpop.f32.mrb[0].mxu0
  %v347 = vadd.f32 %v65, %v346
  %v348 = vpop.f32.mrb[0].mxu0
  %v349 = vpop.f32.mrb[0].mxu0
  %v350 = vadd.f32 %v65, %v349
  %v351 = vpop.f32.mrb[0].mxu0
  %352 = vmatprep.mubr.bf16.mxu0 0
  %353 = vmatmul.mubr.bf16.gmra.mrb[0].mxu0 %v194
  %v354 = vpop.f32.mrb[0].mxu0
  %v355 = vadd.f32 %v65, %v354
  %v356 = vpop.f32.mrb[0].mxu0
  %v357 = vpop.f32.mrb[0].mxu0
  %v358 = vadd.f32 %v65, %v357
  %v359 = vpop.f32.mrb[0].mxu0
  %360 = vdwg.mxu0
  %v361 = vmax.f32 %v235, 0.0
  %v362 = vmax.f32 %v238, 0.0
  %v363 = vmax.f32 %v243, 0.0
  %v364 = vmax.f32 %v246, 0.0
  %v365 = vmax.f32 %v251, 0.0
  %v366 = vmax.f32 %v254, 0.0
  %v367 = vmax.f32 %v259, 0.0
  %v368 = vmax.f32 %v262, 0.0
  %v369 = vmax.f32 %v267, 0.0
  %v370 = vmax.f32 %v270, 0.0
  %v371 = vmax.f32 %v275, 0.0
  %v372 = vmax.f32 %v278, 0.0
  %v373 = vmax.f32 %v283, 0.0
  %v374 = vmax.f32 %v286, 0.0
  %v375 = vmax.f32 %v291, 0.0
  %v376 = vmax.f32 %v294, 0.0
  %v377 = vmax.f32 %v299, 0.0
  %v378 = vmax.f32 %v302, 0.0
  %v379 = vmax.f32 %v307, 0.0
  %v380 = vmax.f32 %v310, 0.0
  %v381 = vmax.f32 %v315, 0.0
  %v382 = vmax.f32 %v318, 0.0
  %v383 = vmax.f32 %v323, 0.0
  %v384 = vmax.f32 %v326, 0.0
  %v385 = vmax.f32 %v331, 0.0
  %v386 = vmax.f32 %v334, 0.0
  %v387 = vmax.f32 %v339, 0.0
  %v388 = vmax.f32 %v342, 0.0
  %v389 = vmax.f32 %v347, 0.0
  %v390 = vmax.f32 %v350, 0.0
  %v391 = vmax.f32 %v355, 0.0
  %v392 = vmax.f32 %v358, 0.0
  %v393 = vpack.c.bf16 %v362, %v361
  %v394 = vpack.c.bf16 %v364, %v363
  %v395 = vpack.c.bf16 %v366, %v365
  %v396 = vpack.c.bf16 %v368, %v367
  %v397 = vpack.c.bf16 %v370, %v369
  %v398 = vpack.c.bf16 %v372, %v371
  %v399 = vpack.c.bf16 %v374, %v373
  %v400 = vpack.c.bf16 %v376, %v375
  %v401 = vpack.c.bf16 %v378, %v377
  %v402 = vpack.c.bf16 %v380, %v379
  %v403 = vpack.c.bf16 %v382, %v381
  %v404 = vpack.c.bf16 %v384, %v383
  %v405 = vpack.c.bf16 %v386, %v385
  %v406 = vpack.c.bf16 %v388, %v387
  %v407 = vpack.c.bf16 %v390, %v389
  %v408 = vpack.c.bf16 %v392, %v391
  %v409 = vld [vmem:[%s3] sm:$0xf]
  %v410 = vld [vmem:[%s3 + $0x4] sm:$0xf]
  %v411 = vld [vmem:[%s4] sm:$0x1]
  %v413 = vlaneseq
  %v414 = vshrl.u32 %v413, 7
  %v415 = vsub.s32 0, %v414
  %v416 = vrot.slane %v411, %v415
  %v420 = vunpack.c.l.b16 %v409
  %v421 = vunpack.c.l.b16 %v410
  %v422 = vpack.c.b16 %v421, %v420
  %vm424 = vcmask 130048
  %v426 = vsel %vm424, %v393, 0
  %v429 = vsel %vm424, %v394, 0
  %v432 = vsel %vm424, %v395, 0
  %v435 = vsel %vm424, %v396, 0
  %v438 = vsel %vm424, %v397, 0
  %v441 = vsel %vm424, %v398, 0
  %v444 = vsel %vm424, %v399, 0
  %v447 = vsel %vm424, %v400, 0
  %v450 = vsel %vm424, %v401, 0
  %v453 = vsel %vm424, %v402, 0
  %v456 = vsel %vm424, %v403, 0
  %v459 = vsel %vm424, %v404, 0
  %v462 = vsel %vm424, %v405, 0
  %v465 = vsel %vm424, %v406, 0
  %v468 = vsel %vm424, %v407, 0
  %v471 = vsel %vm424, %v408, 0
  %473 = vmatprep.subr.bf16.mxu0 0
  %474 = vmatpush1.bf16.msra.mxu0 %v422
  %475 = vmatprep.subr.bf16.mxu0 0
  %476 = vmatpush1.bf16.msra.mxu0 0
  %477 = vmatprep.subr.bf16.mxu0 0
  %478 = vmatpush1.bf16.msra.mxu0 0
  %479 = vmatprep.subr.bf16.mxu0 0
  %480 = vmatpush1.bf16.msra.mxu0 0
  %481 = vmatprep.subr.bf16.mxu0 0
  %482 = vmatpush1.bf16.msra.mxu0 0
  %483 = vmatprep.subr.bf16.mxu0 0
  %484 = vmatpush1.bf16.msra.mxu0 0
  %485 = vmatprep.subr.bf16.mxu0 0
  %486 = vmatpush1.bf16.msra.mxu0 0
  %487 = vmatprep.subr.bf16.mxu0 0
  %488 = vmatpush1.bf16.msra.mxu0 0
  %489 = vmatprep.subr.bf16.mxu0 0
  %490 = vmatpush1.bf16.msra.mxu0 0
  %491 = vmatprep.subr.bf16.mxu0 0
  %492 = vmatpush1.bf16.msra.mxu0 0
  %493 = vmatprep.subr.bf16.mxu0 0
  %494 = vmatpush1.bf16.msra.mxu0 0
  %495 = vmatprep.subr.bf16.mxu0 0
  %496 = vmatpush1.bf16.msra.mxu0 0
  %497 = vmatprep.subr.bf16.mxu0 0
  %498 = vmatpush1.bf16.msra.mxu0 0
  %499 = vmatprep.subr.bf16.mxu0 0
  %500 = vmatpush1.bf16.msra.mxu0 0
  %501 = vmatprep.subr.bf16.mxu0 0
  %502 = vmatpush1.bf16.msra.mxu0 0
  %503 = vmatprep.subr.bf16.mxu0 0
  %504 = vmatpush1.bf16.msra.mxu0 0
  %505 = vmatprep.mubr.bf16.mxu0 0
  %506 = vmatmul.mubr.bf16.gmra.mrb[0].mxu0 %v426
  %v507 = vpop.f32.mrb[0].mxu0
  %v508 = vadd.f32 %v416, %v507
  %v509 = vpop.f32.mrb[0].mxu0
  %v510 = vpop.f32.mrb[0].mxu0
  %v511 = vadd.f32 %v416, %v510
  %v512 = vpop.f32.mrb[0].mxu0
  %513 = vmatprep.mubr.bf16.mxu0 0
  %514 = vmatmul.mubr.bf16.gmra.mrb[0].mxu0 %v429
  %v515 = vpop.f32.mrb[0].mxu0
  %v516 = vadd.f32 %v416, %v515
  %v517 = vpop.f32.mrb[0].mxu0
  %v518 = vpop.f32.mrb[0].mxu0
  %v519 = vadd.f32 %v416, %v518
  %v520 = vpop.f32.mrb[0].mxu0
  %521 = vmatprep.mubr.bf16.mxu0 0
  %522 = vmatmul.mubr.bf16.gmra.mrb[0].mxu0 %v432
  %v523 = vpop.f32.mrb[0].mxu0
  %v524 = vadd.f32 %v416, %v523
  %v525 = vpop.f32.mrb[0].mxu0
  %v526 = vpop.f32.mrb[0].mxu0
  %v527 = vadd.f32 %v416, %v526
  %v528 = vpop.f32.mrb[0].mxu0
  %529 = vmatprep.mubr.bf16.mxu0 0
  %530 = vmatmul.mubr.bf16.gmra.mrb[0].mxu0 %v435
  %v531 = vpop.f32.mrb[0].mxu0
  %v532 = vadd.f32 %v416, %v531
  %v533 = vpop.f32.mrb[0].mxu0
  %v534 = vpop.f32.mrb[0].mxu0
  %v535 = vadd.f32 %v416, %v534
  %v536 = vpop.f32.mrb[0].mxu0
  %537 = vmatprep.mubr.bf16.mxu0 0
  %538 = vmatmul.mubr.bf16.gmra.mrb[0].mxu0 %v438
  %v539 = vpop.f32.mrb[0].mxu0
  %v540 = vadd.f32 %v416, %v539
  %v541 = vpop.f32.mrb[0].mxu0
  %v542 = vpop.f32.mrb[0].mxu0
  %v543 = vadd.f32 %v416, %v542
  %v544 = vpop.f32.mrb[0].mxu0
  %545 = vmatprep.mubr.bf16.mxu0 0
  %546 = vmatmul.mubr.bf16.gmra.mrb[0].mxu0 %v441
  %v547 = vpop.f32.mrb[0].mxu0
  %v548 = vadd.f32 %v416, %v547
  %v549 = vpop.f32.mrb[0].mxu0
  %v550 = vpop.f32.mrb[0].mxu0
  %v551 = vadd.f32 %v416, %v550
  %v552 = vpop.f32.mrb[0].mxu0
  %553 = vmatprep.mubr.bf16.mxu0 0
  %554 = vmatmul.mubr.bf16.gmra.mrb[0].mxu0 %v444
  %v555 = vpop.f32.mrb[0].mxu0
  %v556 = vadd.f32 %v416, %v555
  %v557 = vpop.f32.mrb[0].mxu0
  %v558 = vpop.f32.mrb[0].mxu0
  %v559 = vadd.f32 %v416, %v558
  %v560 = vpop.f32.mrb[0].mxu0
  %561 = vmatprep.mubr.bf16.mxu0 0
  %562 = vmatmul.mubr.bf16.gmra.mrb[0].mxu0 %v447
  %v563 = vpop.f32.mrb[0].mxu0
  %v564 = vadd.f32 %v416, %v563
  %v565 = vpop.f32.mrb[0].mxu0
  %v566 = vpop.f32.mrb[0].mxu0
  %v567 = vadd.f32 %v416, %v566
  %v568 = vpop.f32.mrb[0].mxu0
  %569 = vmatprep.mubr.bf16.mxu0 0
  %570 = vmatmul.mubr.bf16.gmra.mrb[0].mxu0 %v450
  %v571 = vpop.f32.mrb[0].mxu0
  %v572 = vadd.f32 %v416, %v571
  %v573 = vpop.f32.mrb[0].mxu0
  %v574 = vpop.f32.mrb[0].mxu0
  %v575 = vadd.f32 %v416, %v574
  %v576 = vpop.f32.mrb[0].mxu0
  %577 = vmatprep.mubr.bf16.mxu0 0
  %578 = vmatmul.mubr.bf16.gmra.mrb[0].mxu0 %v453
  %v579 = vpop.f32.mrb[0].mxu0
  %v580 = vadd.f32 %v416, %v579
  %v581 = vpop.f32.mrb[0].mxu0
  %v582 = vpop.f32.mrb[0].mxu0
  %v583 = vadd.f32 %v416, %v582
  %v584 = vpop.f32.mrb[0].mxu0
  %585 = vmatprep.mubr.bf16.mxu0 0
  %586 = vmatmul.mubr.bf16.gmra.mrb[0].mxu0 %v456
  %v587 = vpop.f32.mrb[0].mxu0
  %v588 = vadd.f32 %v416, %v587
  %v589 = vpop.f32.mrb[0].mxu0
  %v590 = vpop.f32.mrb[0].mxu0
  %v591 = vadd.f32 %v416, %v590
  %v592 = vpop.f32.mrb[0].mxu0
  %593 = vmatprep.mubr.bf16.mxu0 0
  %594 = vmatmul.mubr.bf16.gmra.mrb[0].mxu0 %v459
  %v595 = vpop.f32.mrb[0].mxu0
  %v596 = vadd.f32 %v416, %v595
  %v597 = vpop.f32.mrb[0].mxu0
  %v598 = vpop.f32.mrb[0].mxu0
  %v599 = vadd.f32 %v416, %v598
  %v600 = vpop.f32.mrb[0].mxu0
  %601 = vmatprep.mubr.bf16.mxu0 0
  %602 = vmatmul.mubr.bf16.gmra.mrb[0].mxu0 %v462
  %v603 = vpop.f32.mrb[0].mxu0
  %v604 = vadd.f32 %v416, %v603
  %v605 = vpop.f32.mrb[0].mxu0
  %v606 = vpop.f32.mrb[0].mxu0
  %v607 = vadd.f32 %v416, %v606
  %v608 = vpop.f32.mrb[0].mxu0
  %609 = vmatprep.mubr.bf16.mxu0 0
  %610 = vmatmul.mubr.bf16.gmra.mrb[0].mxu0 %v465
  %v611 = vpop.f32.mrb[0].mxu0
  %v612 = vadd.f32 %v416, %v611
  %v613 = vpop.f32.mrb[0].mxu0
  %v614 = vpop.f32.mrb[0].mxu0
  %v615 = vadd.f32 %v416, %v614
  %v616 = vpop.f32.mrb[0].mxu0
  %617 = vmatprep.mubr.bf16.mxu0 0
  %618 = vmatmul.mubr.bf16.gmra.mrb[0].mxu0 %v468
  %v619 = vpop.f32.mrb[0].mxu0
  %v620 = vadd.f32 %v416, %v619
  %v621 = vpop.f32.mrb[0].mxu0
  %v622 = vpop.f32.mrb[0].mxu0
  %v623 = vadd.f32 %v416, %v622
  %v624 = vpop.f32.mrb[0].mxu0
  %625 = vmatprep.mubr.bf16.mxu0 0
  %626 = vmatmul.mubr.bf16.gmra.mrb[0].mxu0 %v471
  %v627 = vpop.f32.mrb[0].mxu0
  %v628 = vadd.f32 %v416, %v627
  %v629 = vpop.f32.mrb[0].mxu0
  %v630 = vpop.f32.mrb[0].mxu0
  %v631 = vadd.f32 %v416, %v630
  %v632 = vpop.f32.mrb[0].mxu0
  %633 = vdwg.mxu0
  %v634 = vmax.f32 %v508, 0.0
  %v635 = vmax.f32 %v511, 0.0
  %v636 = vmax.f32 %v516, 0.0
  %v637 = vmax.f32 %v519, 0.0
  %v638 = vmax.f32 %v524, 0.0
  %v639 = vmax.f32 %v527, 0.0
  %v640 = vmax.f32 %v532, 0.0
  %v641 = vmax.f32 %v535, 0.0
  %v642 = vmax.f32 %v540, 0.0
  %v643 = vmax.f32 %v543, 0.0
  %v644 = vmax.f32 %v548, 0.0
  %v645 = vmax.f32 %v551, 0.0
  %v646 = vmax.f32 %v556, 0.0
  %v647 = vmax.f32 %v559, 0.0
  %v648 = vmax.f32 %v564, 0.0
  %v649 = vmax.f32 %v567, 0.0
  %v650 = vmax.f32 %v572, 0.0
  %v651 = vmax.f32 %v575, 0.0
  %v652 = vmax.f32 %v580, 0.0
  %v653 = vmax.f32 %v583, 0.0
  %v654 = vmax.f32 %v588, 0.0
  %v655 = vmax.f32 %v591, 0.0
  %v656 = vmax.f32 %v596, 0.0
  %v657 = vmax.f32 %v599, 0.0
  %v658 = vmax.f32 %v604, 0.0
  %v659 = vmax.f32 %v607, 0.0
  %v660 = vmax.f32 %v612, 0.0
  %v661 = vmax.f32 %v615, 0.0
  %v662 = vmax.f32 %v620, 0.0
  %v663 = vmax.f32 %v623, 0.0
  %v664 = vmax.f32 %v628, 0.0
  %v665 = vmax.f32 %v631, 0.0
  %v666 = vpack.c.bf16 %v635, %v634
  %v667 = vpack.c.bf16 %v637, %v636
  %v668 = vpack.c.bf16 %v639, %v638
  %v669 = vpack.c.bf16 %v641, %v640
  %v670 = vpack.c.bf16 %v643, %v642
  %v671 = vpack.c.bf16 %v645, %v644
  %v672 = vpack.c.bf16 %v647, %v646
  %v673 = vpack.c.bf16 %v649, %v648
  %v674 = vpack.c.bf16 %v651, %v650
  %v675 = vpack.c.bf16 %v653, %v652
  %v676 = vpack.c.bf16 %v655, %v654
  %v677 = vpack.c.bf16 %v657, %v656
  %v678 = vpack.c.bf16 %v659, %v658
  %v679 = vpack.c.bf16 %v661, %v660
  %v680 = vpack.c.bf16 %v663, %v662
  %v681 = vpack.c.bf16 %v665, %v664
  %v682 = vld [vmem:[%s5] sm:$0xf]
  %v683 = vld [vmem:[%s5 + $0x4] sm:$0xf]
  %v684 = vld [vmem:[%s5 + $0x8] sm:$0xf]
  %v685 = vld [vmem:[%s5 + $0xc] sm:$0xf]
  %v686 = vld [vmem:[%s6] sm:$0x1]
  %v688 = vlaneseq
  %v689 = vshrl.u32 %v688, 7
  %v690 = vsub.s32 0, %v689
  %v691 = vrot.slane %v686, %v690
  %v697 = vunpack.c.l.b16 %v682
  %v698 = vunpack.c.l.b16 %v683
  %v699 = vunpack.c.l.b16 %v684
  %v700 = vunpack.c.l.b16 %v685
  %v701 = vpack.c.b16 %v698, %v697
  %v702 = vpack.c.b16 %v700, %v699
  %vm705 = vcmask 261120
  %v707 = vsel %vm705, %v666, 0
  %v710 = vsel %vm705, %v667, 0
  %v713 = vsel %vm705, %v668, 0
  %v716 = vsel %vm705, %v669, 0
  %v719 = vsel %vm705, %v670, 0
  %v722 = vsel %vm705, %v671, 0
  %v725 = vsel %vm705, %v672, 0
  %v728 = vsel %vm705, %v673, 0
  %v731 = vsel %vm705, %v674, 0
  %v734 = vsel %vm705, %v675, 0
  %v737 = vsel %vm705, %v676, 0
  %v740 = vsel %vm705, %v677, 0
  %v743 = vsel %vm705, %v678, 0
  %v746 = vsel %vm705, %v679, 0
  %v749 = vsel %vm705, %v680, 0
  %v752 = vsel %vm705, %v681, 0
  %754 = vmatprep.subr.bf16.mxu0 0
  %755 = vmatpush1.bf16.msra.mxu0 %v701
  %756 = vmatprep.subr.bf16.mxu0 0
  %757 = vmatpush1.bf16.msra.mxu0 %v702
  %758 = vmatprep.subr.bf16.mxu0 0
  %759 = vmatpush1.bf16.msra.mxu0 0
  %760 = vmatprep.subr.bf16.mxu0 0
  %761 = vmatpush1.bf16.msra.mxu0 0
  %762 = vmatprep.subr.bf16.mxu0 0
  %763 = vmatpush1.bf16.msra.mxu0 0
  %764 = vmatprep.subr.bf16.mxu0 0
  %765 = vmatpush1.bf16.msra.mxu0 0
  %766 = vmatprep.subr.bf16.mxu0 0
  %767 = vmatpush1.bf16.msra.mxu0 0
  %768 = vmatprep.subr.bf16.mxu0 0
  %769 = vmatpush1.bf16.msra.mxu0 0
  %770 = vmatprep.subr.bf16.mxu0 0
  %771 = vmatpush1.bf16.msra.mxu0 0
  %772 = vmatprep.subr.bf16.mxu0 0
  %773 = vmatpush1.bf16.msra.mxu0 0
  %774 = vmatprep.subr.bf16.mxu0 0
  %775 = vmatpush1.bf16.msra.mxu0 0
  %776 = vmatprep.subr.bf16.mxu0 0
  %777 = vmatpush1.bf16.msra.mxu0 0
  %778 = vmatprep.subr.bf16.mxu0 0
  %779 = vmatpush1.bf16.msra.mxu0 0
  %780 = vmatprep.subr.bf16.mxu0 0
  %781 = vmatpush1.bf16.msra.mxu0 0
  %782 = vmatprep.subr.bf16.mxu0 0
  %783 = vmatpush1.bf16.msra.mxu0 0
  %784 = vmatprep.subr.bf16.mxu0 0
  %785 = vmatpush1.bf16.msra.mxu0 0
  %786 = vmatprep.mubr.bf16.mxu0 0
  %787 = vmatmul.mubr.bf16.gmra.mrb[0].mxu0 %v707
  %v788 = vpop.f32.mrb[0].mxu0
  %v789 = vadd.f32 %v691, %v788
  %v790 = vpop.f32.mrb[0].mxu0
  %v791 = vpop.f32.mrb[0].mxu0
  %v792 = vadd.f32 %v691, %v791
  %v793 = vpop.f32.mrb[0].mxu0
  %794 = vmatprep.mubr.bf16.mxu0 0
  %795 = vmatmul.mubr.bf16.gmra.mrb[0].mxu0 %v710
  %v796 = vpop.f32.mrb[0].mxu0
  %v797 = vadd.f32 %v691, %v796
  %v798 = vpop.f32.mrb[0].mxu0
  %v799 = vpop.f32.mrb[0].mxu0
  %v800 = vadd.f32 %v691, %v799
  %v801 = vpop.f32.mrb[0].mxu0
  %802 = vmatprep.mubr.bf16.mxu0 0
  %803 = vmatmul.mubr.bf16.gmra.mrb[0].mxu0 %v713
  %v804 = vpop.f32.mrb[0].mxu0
  %v805 = vadd.f32 %v691, %v804
  %v806 = vpop.f32.mrb[0].mxu0
  %v807 = vpop.f32.mrb[0].mxu0
  %v808 = vadd.f32 %v691, %v807
  %v809 = vpop.f32.mrb[0].mxu0
  %810 = vmatprep.mubr.bf16.mxu0 0
  %811 = vmatmul.mubr.bf16.gmra.mrb[0].mxu0 %v716
  %v812 = vpop.f32.mrb[0].mxu0
  %v813 = vadd.f32 %v691, %v812
  %v814 = vpop.f32.mrb[0].mxu0
  %v815 = vpop.f32.mrb[0].mxu0
  %v816 = vadd.f32 %v691, %v815
  %v817 = vpop.f32.mrb[0].mxu0
  %818 = vmatprep.mubr.bf16.mxu0 0
  %819 = vmatmul.mubr.bf16.gmra.mrb[0].mxu0 %v719
  %v820 = vpop.f32.mrb[0].mxu0
  %v821 = vadd.f32 %v691, %v820
  %v822 = vpop.f32.mrb[0].mxu0
  %v823 = vpop.f32.mrb[0].mxu0
  %v824 = vadd.f32 %v691, %v823
  %v825 = vpop.f32.mrb[0].mxu0
  %826 = vmatprep.mubr.bf16.mxu0 0
  %827 = vmatmul.mubr.bf16.gmra.mrb[0].mxu0 %v722
  %v828 = vpop.f32.mrb[0].mxu0
  %v829 = vadd.f32 %v691, %v828
  %v830 = vpop.f32.mrb[0].mxu0
  %v831 = vpop.f32.mrb[0].mxu0
  %v832 = vadd.f32 %v691, %v831
  %v833 = vpop.f32.mrb[0].mxu0
  %834 = vmatprep.mubr.bf16.mxu0 0
  %835 = vmatmul.mubr.bf16.gmra.mrb[0].mxu0 %v725
  %v836 = vpop.f32.mrb[0].mxu0
  %v837 = vadd.f32 %v691, %v836
  %v838 = vpop.f32.mrb[0].mxu0
  %v839 = vpop.f32.mrb[0].mxu0
  %v840 = vadd.f32 %v691, %v839
  %v841 = vpop.f32.mrb[0].mxu0
  %842 = vmatprep.mubr.bf16.mxu0 0
  %843 = vmatmul.mubr.bf16.gmra.mrb[0].mxu0 %v728
  %v844 = vpop.f32.mrb[0].mxu0
  %v845 = vadd.f32 %v691, %v844
  %v846 = vpop.f32.mrb[0].mxu0
  %v847 = vpop.f32.mrb[0].mxu0
  %v848 = vadd.f32 %v691, %v847
  %v849 = vpop.f32.mrb[0].mxu0
  %850 = vmatprep.mubr.bf16.mxu0 0
  %851 = vmatmul.mubr.bf16.gmra.mrb[0].mxu0 %v731
  %v852 = vpop.f32.mrb[0].mxu0
  %v853 = vadd.f32 %v691, %v852
  %v854 = vpop.f32.mrb[0].mxu0
  %v855 = vpop.f32.mrb[0].mxu0
  %v856 = vadd.f32 %v691, %v855
  %v857 = vpop.f32.mrb[0].mxu0
  %858 = vmatprep.mubr.bf16.mxu0 0
  %859 = vmatmul.mubr.bf16.gmra.mrb[0].mxu0 %v734
  %v860 = vpop.f32.mrb[0].mxu0
  %v861 = vadd.f32 %v691, %v860
  %v862 = vpop.f32.mrb[0].mxu0
  %v863 = vpop.f32.mrb[0].mxu0
  %v864 = vadd.f32 %v691, %v863
  %v865 = vpop.f32.mrb[0].mxu0
  %866 = vmatprep.mubr.bf16.mxu0 0
  %867 = vmatmul.mubr.bf16.gmra.mrb[0].mxu0 %v737
  %v868 = vpop.f32.mrb[0].mxu0
  %v869 = vadd.f32 %v691, %v868
  %v870 = vpop.f32.mrb[0].mxu0
  %v871 = vpop.f32.mrb[0].mxu0
  %v872 = vadd.f32 %v691, %v871
  %v873 = vpop.f32.mrb[0].mxu0
  %874 = vmatprep.mubr.bf16.mxu0 0
  %875 = vmatmul.mubr.bf16.gmra.mrb[0].mxu0 %v740
  %v876 = vpop.f32.mrb[0].mxu0
  %v877 = vadd.f32 %v691, %v876
  %v878 = vpop.f32.mrb[0].mxu0
  %v879 = vpop.f32.mrb[0].mxu0
  %v880 = vadd.f32 %v691, %v879
  %v881 = vpop.f32.mrb[0].mxu0
  %882 = vmatprep.mubr.bf16.mxu0 0
  %883 = vmatmul.mubr.bf16.gmra.mrb[0].mxu0 %v743
  %v884 = vpop.f32.mrb[0].mxu0
  %v885 = vadd.f32 %v691, %v884
  %v886 = vpop.f32.mrb[0].mxu0
  %v887 = vpop.f32.mrb[0].mxu0
  %v888 = vadd.f32 %v691, %v887
  %v889 = vpop.f32.mrb[0].mxu0
  %890 = vmatprep.mubr.bf16.mxu0 0
  %891 = vmatmul.mubr.bf16.gmra.mrb[0].mxu0 %v746
  %v892 = vpop.f32.mrb[0].mxu0
  %v893 = vadd.f32 %v691, %v892
  %v894 = vpop.f32.mrb[0].mxu0
  %v895 = vpop.f32.mrb[0].mxu0
  %v896 = vadd.f32 %v691, %v895
  %v897 = vpop.f32.mrb[0].mxu0
  %898 = vmatprep.mubr.bf16.mxu0 0
  %899 = vmatmul.mubr.bf16.gmra.mrb[0].mxu0 %v749
  %v900 = vpop.f32.mrb[0].mxu0
  %v901 = vadd.f32 %v691, %v900
  %v902 = vpop.f32.mrb[0].mxu0
  %v903 = vpop.f32.mrb[0].mxu0
  %v904 = vadd.f32 %v691, %v903
  %v905 = vpop.f32.mrb[0].mxu0
  %906 = vmatprep.mubr.bf16.mxu0 0
  %907 = vmatmul.mubr.bf16.gmra.mrb[0].mxu0 %v752
  %v908 = vpop.f32.mrb[0].mxu0
  %v909 = vadd.f32 %v691, %v908
  %v910 = vpop.f32.mrb[0].mxu0
  %v911 = vpop.f32.mrb[0].mxu0
  %v912 = vadd.f32 %v691, %v911
  %v913 = vpop.f32.mrb[0].mxu0
  %914 = vdwg.mxu0
  %v915 = vmax.f32 %v789, 0.0
  %v916 = vmax.f32 %v792, 0.0
  %v917 = vmax.f32 %v797, 0.0
  %v918 = vmax.f32 %v800, 0.0
  %v919 = vmax.f32 %v805, 0.0
  %v920 = vmax.f32 %v808, 0.0
  %v921 = vmax.f32 %v813, 0.0
  %v922 = vmax.f32 %v816, 0.0
  %v923 = vmax.f32 %v821, 0.0
  %v924 = vmax.f32 %v824, 0.0
  %v925 = vmax.f32 %v829, 0.0
  %v926 = vmax.f32 %v832, 0.0
  %v927 = vmax.f32 %v837, 0.0
  %v928 = vmax.f32 %v840, 0.0
  %v929 = vmax.f32 %v845, 0.0
  %v930 = vmax.f32 %v848, 0.0
  %v931 = vmax.f32 %v853, 0.0
  %v932 = vmax.f32 %v856, 0.0
  %v933 = vmax.f32 %v861, 0.0
  %v934 = vmax.f32 %v864, 0.0
  %v935 = vmax.f32 %v869, 0.0
  %v936 = vmax.f32 %v872, 0.0
  %v937 = vmax.f32 %v877, 0.0
  %v938 = vmax.f32 %v880, 0.0
  %v939 = vmax.f32 %v885, 0.0
  %v940 = vmax.f32 %v888, 0.0
  %v941 = vmax.f32 %v893, 0.0
  %v942 = vmax.f32 %v896, 0.0
  %v943 = vmax.f32 %v901, 0.0
  %v944 = vmax.f32 %v904, 0.0
  %v945 = vmax.f32 %v909, 0.0
  %v946 = vmax.f32 %v912, 0.0
  %vm947 = vcmask 523264
  %v948 = vsel %vm947, %v915, -inf
  %v949 = vrot.slane %v948, 4
  %v950 = vmax.f32 %v948, %v949
  %v951 = vrot.slane %v950, 2
  %v952 = vmax.f32 %v950, %v951
  %v953 = vrot.slane %v952, 1
  %v954 = vmax.f32 %v952, %v953
  %v955 = vsel %vm947, %v916, -inf
  %v956 = vrot.slane %v955, 4
  %v957 = vmax.f32 %v955, %v956
  %v958 = vrot.slane %v957, 2
  %v959 = vmax.f32 %v957, %v958
  %v960 = vrot.slane %v959, 1
  %v961 = vmax.f32 %v959, %v960
  %v962 = vsel %vm947, %v917, -inf
  %v963 = vrot.slane %v962, 4
  %v964 = vmax.f32 %v962, %v963
  %v965 = vrot.slane %v964, 2
  %v966 = vmax.f32 %v964, %v965
  %v967 = vrot.slane %v966, 1
  %v968 = vmax.f32 %v966, %v967
  %v969 = vsel %vm947, %v918, -inf
  %v970 = vrot.slane %v969, 4
  %v971 = vmax.f32 %v969, %v970
  %v972 = vrot.slane %v971, 2
  %v973 = vmax.f32 %v971, %v972
  %v974 = vrot.slane %v973, 1
  %v975 = vmax.f32 %v973, %v974
  %v976 = vsel %vm947, %v919, -inf
  %v977 = vrot.slane %v976, 4
  %v978 = vmax.f32 %v976, %v977
  %v979 = vrot.slane %v978, 2
  %v980 = vmax.f32 %v978, %v979
  %v981 = vrot.slane %v980, 1
  %v982 = vmax.f32 %v980, %v981
  %v983 = vsel %vm947, %v920, -inf
  %v984 = vrot.slane %v983, 4
  %v985 = vmax.f32 %v983, %v984
  %v986 = vrot.slane %v985, 2
  %v987 = vmax.f32 %v985, %v986
  %v988 = vrot.slane %v987, 1
  %v989 = vmax.f32 %v987, %v988
  %v990 = vsel %vm947, %v921, -inf
  %v991 = vrot.slane %v990, 4
  %v992 = vmax.f32 %v990, %v991
  %v993 = vrot.slane %v992, 2
  %v994 = vmax.f32 %v992, %v993
  %v995 = vrot.slane %v994, 1
  %v996 = vmax.f32 %v994, %v995
  %v997 = vsel %vm947, %v922, -inf
  %v998 = vrot.slane %v997, 4
  %v999 = vmax.f32 %v997, %v998
  %v1000 = vrot.slane %v999, 2
  %v1001 = vmax.f32 %v999, %v1000
  %v1002 = vrot.slane %v1001, 1
  %v1003 = vmax.f32 %v1001, %v1002
  %v1004 = vsel %vm947, %v923, -inf
  %v1005 = vrot.slane %v1004, 4
  %v1006 = vmax.f32 %v1004, %v1005
  %v1007 = vrot.slane %v1006, 2
  %v1008 = vmax.f32 %v1006, %v1007
  %v1009 = vrot.slane %v1008, 1
  %v1010 = vmax.f32 %v1008, %v1009
  %v1011 = vsel %vm947, %v924, -inf
  %v1012 = vrot.slane %v1011, 4
  %v1013 = vmax.f32 %v1011, %v1012
  %v1014 = vrot.slane %v1013, 2
  %v1015 = vmax.f32 %v1013, %v1014
  %v1016 = vrot.slane %v1015, 1
  %v1017 = vmax.f32 %v1015, %v1016
  %v1018 = vsel %vm947, %v925, -inf
  %v1019 = vrot.slane %v1018, 4
  %v1020 = vmax.f32 %v1018, %v1019
  %v1021 = vrot.slane %v1020, 2
  %v1022 = vmax.f32 %v1020, %v1021
  %v1023 = vrot.slane %v1022, 1
  %v1024 = vmax.f32 %v1022, %v1023
  %v1025 = vsel %vm947, %v926, -inf
  %v1026 = vrot.slane %v1025, 4
  %v1027 = vmax.f32 %v1025, %v1026
  %v1028 = vrot.slane %v1027, 2
  %v1029 = vmax.f32 %v1027, %v1028
  %v1030 = vrot.slane %v1029, 1
  %v1031 = vmax.f32 %v1029, %v1030
  %v1032 = vsel %vm947, %v927, -inf
  %v1033 = vrot.slane %v1032, 4
  %v1034 = vmax.f32 %v1032, %v1033
  %v1035 = vrot.slane %v1034, 2
  %v1036 = vmax.f32 %v1034, %v1035
  %v1037 = vrot.slane %v1036, 1
  %v1038 = vmax.f32 %v1036, %v1037
  %v1039 = vsel %vm947, %v928, -inf
  %v1040 = vrot.slane %v1039, 4
  %v1041 = vmax.f32 %v1039, %v1040
  %v1042 = vrot.slane %v1041, 2
  %v1043 = vmax.f32 %v1041, %v1042
  %v1044 = vrot.slane %v1043, 1
  %v1045 = vmax.f32 %v1043, %v1044
  %v1046 = vsel %vm947, %v929, -inf
  %v1047 = vrot.slane %v1046, 4
  %v1048 = vmax.f32 %v1046, %v1047
  %v1049 = vrot.slane %v1048, 2
  %v1050 = vmax.f32 %v1048, %v1049
  %v1051 = vrot.slane %v1050, 1
  %v1052 = vmax.f32 %v1050, %v1051
  %v1053 = vsel %vm947, %v930, -inf
  %v1054 = vrot.slane %v1053, 4
  %v1055 = vmax.f32 %v1053, %v1054
  %v1056 = vrot.slane %v1055, 2
  %v1057 = vmax.f32 %v1055, %v1056
  %v1058 = vrot.slane %v1057, 1
  %v1059 = vmax.f32 %v1057, %v1058
  %v1060 = vsel %vm947, %v931, -inf
  %v1061 = vrot.slane %v1060, 4
  %v1062 = vmax.f32 %v1060, %v1061
  %v1063 = vrot.slane %v1062, 2
  %v1064 = vmax.f32 %v1062, %v1063
  %v1065 = vrot.slane %v1064, 1
  %v1066 = vmax.f32 %v1064, %v1065
  %v1067 = vsel %vm947, %v932, -inf
  %v1068 = vrot.slane %v1067, 4
  %v1069 = vmax.f32 %v1067, %v1068
  %v1070 = vrot.slane %v1069, 2
  %v1071 = vmax.f32 %v1069, %v1070
  %v1072 = vrot.slane %v1071, 1
  %v1073 = vmax.f32 %v1071, %v1072
  %v1074 = vsel %vm947, %v933, -inf
  %v1075 = vrot.slane %v1074, 4
  %v1076 = vmax.f32 %v1074, %v1075
  %v1077 = vrot.slane %v1076, 2
  %v1078 = vmax.f32 %v1076, %v1077
  %v1079 = vrot.slane %v1078, 1
  %v1080 = vmax.f32 %v1078, %v1079
  %v1081 = vsel %vm947, %v934, -inf
  %v1082 = vrot.slane %v1081, 4
  %v1083 = vmax.f32 %v1081, %v1082
  %v1084 = vrot.slane %v1083, 2
  %v1085 = vmax.f32 %v1083, %v1084
  %v1086 = vrot.slane %v1085, 1
  %v1087 = vmax.f32 %v1085, %v1086
  %v1088 = vsel %vm947, %v935, -inf
  %v1089 = vrot.slane %v1088, 4
  %v1090 = vmax.f32 %v1088, %v1089
  %v1091 = vrot.slane %v1090, 2
  %v1092 = vmax.f32 %v1090, %v1091
  %v1093 = vrot.slane %v1092, 1
  %v1094 = vmax.f32 %v1092, %v1093
  %v1095 = vsel %vm947, %v936, -inf
  %v1096 = vrot.slane %v1095, 4
  %v1097 = vmax.f32 %v1095, %v1096
  %v1098 = vrot.slane %v1097, 2
  %v1099 = vmax.f32 %v1097, %v1098
  %v1100 = vrot.slane %v1099, 1
  %v1101 = vmax.f32 %v1099, %v1100
  %v1102 = vsel %vm947, %v937, -inf
  %v1103 = vrot.slane %v1102, 4
  %v1104 = vmax.f32 %v1102, %v1103
  %v1105 = vrot.slane %v1104, 2
  %v1106 = vmax.f32 %v1104, %v1105
  %v1107 = vrot.slane %v1106, 1
  %v1108 = vmax.f32 %v1106, %v1107
  %v1109 = vsel %vm947, %v938, -inf
  %v1110 = vrot.slane %v1109, 4
  %v1111 = vmax.f32 %v1109, %v1110
  %v1112 = vrot.slane %v1111, 2
  %v1113 = vmax.f32 %v1111, %v1112
  %v1114 = vrot.slane %v1113, 1
  %v1115 = vmax.f32 %v1113, %v1114
  %v1116 = vsel %vm947, %v939, -inf
  %v1117 = vrot.slane %v1116, 4
  %v1118 = vmax.f32 %v1116, %v1117
  %v1119 = vrot.slane %v1118, 2
  %v1120 = vmax.f32 %v1118, %v1119
  %v1121 = vrot.slane %v1120, 1
  %v1122 = vmax.f32 %v1120, %v1121
  %v1123 = vsel %vm947, %v940, -inf
  %v1124 = vrot.slane %v1123, 4
  %v1125 = vmax.f32 %v1123, %v1124
  %v1126 = vrot.slane %v1125, 2
  %v1127 = vmax.f32 %v1125, %v1126
  %v1128 = vrot.slane %v1127, 1
  %v1129 = vmax.f32 %v1127, %v1128
  %v1130 = vsel %vm947, %v941, -inf
  %v1131 = vrot.slane %v1130, 4
  %v1132 = vmax.f32 %v1130, %v1131
  %v1133 = vrot.slane %v1132, 2
  %v1134 = vmax.f32 %v1132, %v1133
  %v1135 = vrot.slane %v1134, 1
  %v1136 = vmax.f32 %v1134, %v1135
  %v1137 = vsel %vm947, %v942, -inf
  %v1138 = vrot.slane %v1137, 4
  %v1139 = vmax.f32 %v1137, %v1138
  %v1140 = vrot.slane %v1139, 2
  %v1141 = vmax.f32 %v1139, %v1140
  %v1142 = vrot.slane %v1141, 1
  %v1143 = vmax.f32 %v1141, %v1142
  %v1144 = vsel %vm947, %v943, -inf
  %v1145 = vrot.slane %v1144, 4
  %v1146 = vmax.f32 %v1144, %v1145
  %v1147 = vrot.slane %v1146, 2
  %v1148 = vmax.f32 %v1146, %v1147
  %v1149 = vrot.slane %v1148, 1
  %v1150 = vmax.f32 %v1148, %v1149
  %v1151 = vsel %vm947, %v944, -inf
  %v1152 = vrot.slane %v1151, 4
  %v1153 = vmax.f32 %v1151, %v1152
  %v1154 = vrot.slane %v1153, 2
  %v1155 = vmax.f32 %v1153, %v1154
  %v1156 = vrot.slane %v1155, 1
  %v1157 = vmax.f32 %v1155, %v1156
  %v1158 = vsel %vm947, %v945, -inf
  %v1159 = vrot.slane %v1158, 4
  %v1160 = vmax.f32 %v1158, %v1159
  %v1161 = vrot.slane %v1160, 2
  %v1162 = vmax.f32 %v1160, %v1161
  %v1163 = vrot.slane %v1162, 1
  %v1164 = vmax.f32 %v1162, %v1163
  %v1165 = vsel %vm947, %v946, -inf
  %v1166 = vrot.slane %v1165, 4
  %v1167 = vmax.f32 %v1165, %v1166
  %v1168 = vrot.slane %v1167, 2
  %v1169 = vmax.f32 %v1167, %v1168
  %v1170 = vrot.slane %v1169, 1
  %v1171 = vmax.f32 %v1169, %v1170
  %v1172 = vpack.c.bf16 %v954, %v954
  %v1173 = vpack.c.bf16 %v961, %v961
  %v1174 = vpack.c.bf16 %v968, %v968
  %v1175 = vpack.c.bf16 %v975, %v975
  %v1176 = vpack.c.bf16 %v982, %v982
  %v1177 = vpack.c.bf16 %v989, %v989
  %v1178 = vpack.c.bf16 %v996, %v996
  %v1179 = vpack.c.bf16 %v1003, %v1003
  %v1180 = vpack.c.bf16 %v1010, %v1010
  %v1181 = vpack.c.bf16 %v1017, %v1017
  %v1182 = vpack.c.bf16 %v1024, %v1024
  %v1183 = vpack.c.bf16 %v1031, %v1031
  %v1184 = vpack.c.bf16 %v1038, %v1038
  %v1185 = vpack.c.bf16 %v1045, %v1045
  %v1186 = vpack.c.bf16 %v1052, %v1052
  %v1187 = vpack.c.bf16 %v1059, %v1059
  %v1188 = vpack.c.bf16 %v1066, %v1066
  %v1189 = vpack.c.bf16 %v1073, %v1073
  %v1190 = vpack.c.bf16 %v1080, %v1080
  %v1191 = vpack.c.bf16 %v1087, %v1087
  %v1192 = vpack.c.bf16 %v1094, %v1094
  %v1193 = vpack.c.bf16 %v1101, %v1101
  %v1194 = vpack.c.bf16 %v1108, %v1108
  %v1195 = vpack.c.bf16 %v1115, %v1115
  %v1196 = vpack.c.bf16 %v1122, %v1122
  %v1197 = vpack.c.bf16 %v1129, %v1129
  %v1198 = vpack.c.bf16 %v1136, %v1136
  %v1199 = vpack.c.bf16 %v1143, %v1143
  %v1200 = vpack.c.bf16 %v1150, %v1150
  %v1201 = vpack.c.bf16 %v1157, %v1157
  %v1202 = vpack.c.bf16 %v1164, %v1164
  %v1203 = vpack.c.bf16 %v1171, %v1171
  %v1236 = vunpack.c.l.b16 %v1172
  %v1237 = vunpack.c.l.b16 %v1173
  %v1238 = vunpack.c.l.b16 %v1174
  %v1239 = vunpack.c.l.b16 %v1175
  %v1240 = vunpack.c.l.b16 %v1176
  %v1241 = vunpack.c.l.b16 %v1177
  %v1242 = vunpack.c.l.b16 %v1178
  %v1243 = vunpack.c.l.b16 %v1179
  %v1244 = vunpack.c.l.b16 %v1180
  %v1245 = vunpack.c.l.b16 %v1181
  %v1246 = vunpack.c.l.b16 %v1182
  %v1247 = vunpack.c.l.b16 %v1183
  %v1248 = vunpack.c.l.b16 %v1184
  %v1249 = vunpack.c.l.b16 %v1185
  %v1250 = vunpack.c.l.b16 %v1186
  %v1251 = vunpack.c.l.b16 %v1187
  %v1252 = vunpack.c.l.b16 %v1188
  %v1253 = vunpack.c.l.b16 %v1189
  %v1254 = vunpack.c.l.b16 %v1190
  %v1255 = vunpack.c.l.b16 %v1191
  %v1256 = vunpack.c.l.b16 %v1192
  %v1257 = vunpack.c.l.b16 %v1193
  %v1258 = vunpack.c.l.b16 %v1194
  %v1259 = vunpack.c.l.b16 %v1195
  %v1260 = vunpack.c.l.b16 %v1196
  %v1261 = vunpack.c.l.b16 %v1197
  %v1262 = vunpack.c.l.b16 %v1198
  %v1263 = vunpack.c.l.b16 %v1199
  %v1264 = vunpack.c.l.b16 %v1200
  %v1265 = vunpack.c.l.b16 %v1201
  %v1266 = vunpack.c.l.b16 %v1202
  %v1267 = vunpack.c.l.b16 %v1203
  %v1268 = vpack.c.b16 %v1236, %v1236
  %v1269 = vpack.c.b16 %v1237, %v1237
  %v1270 = vpack.c.b16 %v1238, %v1238
  %v1271 = vpack.c.b16 %v1239, %v1239
  %v1272 = vpack.c.b16 %v1240, %v1240
  %v1273 = vpack.c.b16 %v1241, %v1241
  %v1274 = vpack.c.b16 %v1242, %v1242
  %v1275 = vpack.c.b16 %v1243, %v1243
  %v1276 = vpack.c.b16 %v1244, %v1244
  %v1277 = vpack.c.b16 %v1245, %v1245
  %v1278 = vpack.c.b16 %v1246, %v1246
  %v1279 = vpack.c.b16 %v1247, %v1247
  %v1280 = vpack.c.b16 %v1248, %v1248
  %v1281 = vpack.c.b16 %v1249, %v1249
  %v1282 = vpack.c.b16 %v1250, %v1250
  %v1283 = vpack.c.b16 %v1251, %v1251
  %v1284 = vpack.c.b16 %v1252, %v1252
  %v1285 = vpack.c.b16 %v1253, %v1253
  %v1286 = vpack.c.b16 %v1254, %v1254
  %v1287 = vpack.c.b16 %v1255, %v1255
  %v1288 = vpack.c.b16 %v1256, %v1256
  %v1289 = vpack.c.b16 %v1257, %v1257
  %v1290 = vpack.c.b16 %v1258, %v1258
  %v1291 = vpack.c.b16 %v1259, %v1259
  %v1292 = vpack.c.b16 %v1260, %v1260
  %v1293 = vpack.c.b16 %v1261, %v1261
  %v1294 = vpack.c.b16 %v1262, %v1262
  %v1295 = vpack.c.b16 %v1263, %v1263
  %v1296 = vpack.c.b16 %v1264, %v1264
  %v1297 = vpack.c.b16 %v1265, %v1265
  %v1298 = vpack.c.b16 %v1266, %v1266
  %v1299 = vpack.c.b16 %v1267, %v1267
  %v1300 = vunpack.c.l.b16 %v1268
  %v1301 = vunpack.c.l.b16 %v1269
  %v1302 = vunpack.c.l.b16 %v1270
  %v1303 = vunpack.c.l.b16 %v1271
  %v1304 = vunpack.c.l.b16 %v1272
  %v1305 = vunpack.c.l.b16 %v1273
  %v1306 = vunpack.c.l.b16 %v1274
  %v1307 = vunpack.c.l.b16 %v1275
  %v1308 = vunpack.c.l.b16 %v1276
  %v1309 = vunpack.c.l.b16 %v1277
  %v1310 = vunpack.c.l.b16 %v1278
  %v1311 = vunpack.c.l.b16 %v1279
  %v1312 = vunpack.c.l.b16 %v1280
  %v1313 = vunpack.c.l.b16 %v1281
  %v1314 = vunpack.c.l.b16 %v1282
  %v1315 = vunpack.c.l.b16 %v1283
  %v1316 = vunpack.c.l.b16 %v1284
  %v1317 = vunpack.c.l.b16 %v1285
  %v1318 = vunpack.c.l.b16 %v1286
  %v1319 = vunpack.c.l.b16 %v1287
  %v1320 = vunpack.c.l.b16 %v1288
  %v1321 = vunpack.c.l.b16 %v1289
  %v1322 = vunpack.c.l.b16 %v1290
  %v1323 = vunpack.c.l.b16 %v1291
  %v1324 = vunpack.c.l.b16 %v1292
  %v1325 = vunpack.c.l.b16 %v1293
  %v1326 = vunpack.c.l.b16 %v1294
  %v1327 = vunpack.c.l.b16 %v1295
  %v1328 = vunpack.c.l.b16 %v1296
  %v1329 = vunpack.c.l.b16 %v1297
  %v1330 = vunpack.c.l.b16 %v1298
  %v1331 = vunpack.c.l.b16 %v1299
  %vm1332 = vcmask 1041409
  %v1333 = vsel %vm1332, %v1301, %v1300
  %vm1334 = vcmask 1042434
  %v1335 = vsel %vm1334, %v1302, %v1333
  %vm1336 = vcmask 1043459
  %v1337 = vsel %vm1336, %v1303, %v1335
  %vm1338 = vcmask 1044484
  %v1339 = vsel %vm1338, %v1304, %v1337
  %vm1340 = vcmask 1045509
  %v1341 = vsel %vm1340, %v1305, %v1339
  %vm1342 = vcmask 1046534
  %v1343 = vsel %vm1342, %v1306, %v1341
  %vm1344 = vcmask 1047559
  %v1345 = vsel %vm1344, %v1307, %v1343
  %v1346 = vsel %vm1332, %v1309, %v1308
  %v1347 = vsel %vm1334, %v1310, %v1346
  %v1348 = vsel %vm1336, %v1311, %v1347
  %v1349 = vsel %vm1338, %v1312, %v1348
  %v1350 = vsel %vm1340, %v1313, %v1349
  %v1351 = vsel %vm1342, %v1314, %v1350
  %v1352 = vsel %vm1344, %v1315, %v1351
  %v1353 = vsel %vm1332, %v1317, %v1316
  %v1354 = vsel %vm1334, %v1318, %v1353
  %v1355 = vsel %vm1336, %v1319, %v1354
  %v1356 = vsel %vm1338, %v1320, %v1355
  %v1357 = vsel %vm1340, %v1321, %v1356
  %v1358 = vsel %vm1342, %v1322, %v1357
  %v1359 = vsel %vm1344, %v1323, %v1358
  %v1360 = vsel %vm1332, %v1325, %v1324
  %v1361 = vsel %vm1334, %v1326, %v1360
  %v1362 = vsel %vm1336, %v1327, %v1361
  %v1363 = vsel %vm1338, %v1328, %v1362
  %v1364 = vsel %vm1340, %v1329, %v1363
  %v1365 = vsel %vm1342, %v1330, %v1364
  %v1366 = vsel %vm1344, %v1331, %v1365
  %v1367 = vpack.c.b16 %v1345, %v1345
  %v1368 = vpack.c.b16 %v1352, %v1352
  %v1369 = vpack.c.b16 %v1359, %v1359
  %v1370 = vpack.c.b16 %v1366, %v1366
  %vm1375 = vcmask 519168
  %1376 = vst.msk [vmem:[%s7] sm:$0xf] %vm1375, %v1367
  %1377 = vst.msk [vmem:[%s7 + $0x4] sm:$0xf] %vm1375, %v1368
  %1378 = vst.msk [vmem:[%s7 + $0x8] sm:$0xf] %vm1375, %v1369
  %1379 = vst.msk [vmem:[%s7 + $0xc] sm:$0xf] %vm1375, %v1370
  // Predicated region
  $region30: #{pointnet_encoder_forward.2} parent=0 // pred_check
    _
  $region31: #{pointnet_encoder_forward.2} parent=0 // pred_check_branch
    %1381 = sbr.rel (0) target = $region33
  $region32: #{pointnet_encoder_forward.2} parent=0 // pred_region
    _
  $region33: #{pointnet_encoder_forward.2} parent=0 // pred_fallthru
    _
  // Predicated region
  $region34: #{pointnet_encoder_forward.2} parent=0 // pred_check
    _
  $region35: #{pointnet_encoder_forward.2} parent=0 // pred_check_branch
    %1383 = sbr.rel (0) target = $region37
  $region36: #{pointnet_encoder_forward.2} parent=0 // pred_region
    _
  $region37: #{pointnet_encoder_forward.2} parent=0 // pred_fallthru
    _

// kernel: pointnet_encoder_forward.3
$region0: #{pointnet_encoder_forward.3}
  #allocation0 [shape = 'u32[]', space=smem, size = 0x4, offset = 0x4, fixed_abs, tag = 'smem constant byte address 0x4 - core index']
  #allocation1 [shape = 'u32[144,128]{1,0:T(1,128)}', space=vmem, size = 0x12000, scoped, tag = 'internal scratch']
  %s0 = inlined_call_operand.vmem [shape: bf16[128,4], index: 0, kind: input, shape index: {}]
  %s1 = inlined_call_operand.vmem [shape: bf16[128,64], index: 1, kind: input, shape index: {}]
  %s2 = inlined_call_operand.vmem [shape: bf16[4,128], index: 2, kind: input, shape index: {}]
  %s3 = inlined_call_operand.vmem [shape: bf16[64,128], index: 3, kind: input, shape index: {}]
  %s4 = inlined_call_operand.vmem [shape: f32[1,128], index: 4, kind: input, shape index: {}]
  %s5 = inlined_call_operand.vmem [shape: bf16[128,128], index: 5, kind: input, shape index: {}]
  %s6 = inlined_call_operand.vmem [shape: f32[1,128], index: 6, kind: input, shape index: {}]
  %s7 = inlined_call_operand.vmem [shape: bf16[128,256], index: 7, kind: input, shape index: {}]
  %s8 = inlined_call_operand.vmem [shape: f32[1,256], index: 8, kind: input, shape index: {}]
  %s9 = inlined_call_operand.vmem [shape: bf16[256,32], index: 9, kind: input, shape index: {}]
  %s10 = inlined_call_operand.vmem [shape: f32[1,32], index: 10, kind: input, shape index: {}]
  %s11 = inlined_call_operand.vmem [shape: bf16[32,32], index: 11, kind: input, shape index: {}]
  %s12 = inlined_call_operand.vmem [shape: f32[1,32], index: 12, kind: input, shape index: {}]
  %s13 = inlined_call_operand.hbm [shape: f32[2,32,64], index: 13, kind: output, shape index: {}]
  %s14 = sld [smem:[#allocation0]]
  $region85: #{pointnet_encoder_forward.3} parent=0
    _
  %s16 = ssub.s32 1, %s14
  %s17 = scalar_select 0, %s16, %s14
  $region1: #{pointnet_encoder_forward.3} parent=0
    #allocation2 [shape = 'u8[32768]{0}', space=vmem, size = 0x8000, scoped, tag = 'output window, operand 0']
    #allocation3 [shape = 's32[2]{0}', space=sflag, size = 0x8, scoped, tag = 'scoped memory for pointnet_encoder_forward.3']
    %18 = vsyncpa [#allocation3], 0
    %s19 = scalar_lea.sflag [#allocation3], 1
    %20 = vsyncpa %s19, 0
    loop: start=0, step=1, limit=4
    $region2: #{pointnet_encoder_forward.3} parent=1 // loop_pre_header
      _
    $region3: #{pointnet_encoder_forward.3} parent=1 // loop_header
      %s22 = sphi 0, %s26
      %p23 = scmp.ge.s32.totalorder %s22, 4
      %s29 = sphi 0, %s41
      %s30 = sphi 0, %s37
      %s31 = sphi 0, %s29
      %s32 = sphi 0, %s30
      %s33 = sphi 0, %s31
      %s34 = sphi 0, %s32
      %s46 = sphi 0, %s48
      %s49 = sphi 0, %s46
      %s50 = sphi 0, %s49
      %s66 = sphi 0, %s50
      %s74 = sphi 0, %s76
      %s77 = sphi 0, %s74
      %s78 = sphi 0, %s77
      %s94 = sphi 0, %s78
      %s98 = sphi 0, %s98
      %s100 = sphi 0, %s98
      %s101 = sphi 0, %s100
      %s115 = sphi 0, %s101
      %s119 = sphi 0, %s119
      %s121 = sphi 0, %s119
      %s122 = sphi 0, %s121
      %s136 = sphi 0, %s122
      %s140 = sphi 0, %s140
      %s142 = sphi 0, %s140
      %s143 = sphi 0, %s142
      %s157 = sphi 0, %s143
      %s161 = sphi 0, %s161
      %s163 = sphi 0, %s161
      %s164 = sphi 0, %s163
      %s178 = sphi 0, %s164
      %s182 = sphi 0, %s182
      %s184 = sphi 0, %s182
      %s185 = sphi 0, %s184
      %s199 = sphi 0, %s185
      %s203 = sphi 0, %s203
      %s205 = sphi 0, %s203
      %s206 = sphi 0, %s205
      %s220 = sphi 0, %s206
      %s224 = sphi 0, %s224
      %s226 = sphi 0, %s224
      %s227 = sphi 0, %s226
      %s241 = sphi 0, %s227
      %s245 = sphi 0, %s245
      %s247 = sphi 0, %s245
      %s248 = sphi 0, %s247
      %s262 = sphi 0, %s248
      %s266 = sphi 0, %s266
      %s268 = sphi 0, %s266
      %s269 = sphi 0, %s268
      %s283 = sphi 0, %s269
      %s287 = sphi 0, %s287
      %s289 = sphi 0, %s287
      %s290 = sphi 0, %s289
      %s304 = sphi 0, %s290
      %s308 = sphi 0, %s308
      %s310 = sphi 0, %s308
      %s311 = sphi 0, %s310
      %s325 = sphi 0, %s311
      %s333 = sphi 0, %s335
      %s336 = sphi 0, %s333
      %s337 = sphi 0, %s336
      %s353 = sphi 0, %s337
    $region4: #{pointnet_encoder_forward.3} parent=1 // loop_header_branch
      %25 = sbr.rel (%p23) target = $region8
    $region5: #{pointnet_encoder_forward.3} parent=1 // loop_body
      %s27 = ssub.s32 %s22, 1
      %s28 = ssub.s32 %s22, 2
      %s35 = sadd.s32 1, %s30
      %p36 = scmp.ge.s32.totalorder %s35, 1
      %s37 = scalar_select %p36, 0, %s35
      %s38 = sadd.s32 1, %s29
      %s39 = scalar_select %p36, %s38, %s29
      %p40 = scmp.ge.s32.totalorder %s39, 2
      %s41 = scalar_select %p40, 0, %s39
      %s42 = sadd.s32 %s29, %s30
      %s43 = sadd.s32 %s41, %s37
      %s44 = ssub.s32 %s42, %s43
      %p45 = scmp.eq.s32.totalorder %s44, 0
      %s47 = sadd.s32 %s46, 1
      %s48 = scalar_select %p45, %s46, %s47
      %p51 = pneg %p45
      %p52 = scmp.eq.s32.totalorder %s22, 1
      %p53 = por %p51, %p52
      %p54 = scmp.ne.s32.totalorder %s46, %s49
      %p55 = scmp.eq.s32.totalorder %s22, 0
      %p56 = por %p54, %p55
      %p57 = scmp.ne.s32.totalorder %s46, %s49
      %p58 = scmp.eq.s32.totalorder %s27, 1
      %p59 = por %p57, %p58
      %p60 = scmp.ne.s32.totalorder %s49, %s50
      %p61 = scmp.eq.s32.totalorder %s27, 0
      %p62 = por %p60, %p61
      %p63 = scmp.ne.s32.totalorder %s49, %s50
      %p64 = scmp.eq.s32.totalorder %s28, 1
      %p65 = por %p63, %p64
      %p67 = scmp.ne.s32.totalorder %s50, %s66
      %p68 = scmp.eq.s32.totalorder %s28, 0
      %p69 = por %p67, %p68
      %s70 = sadd.s32 %s29, %s30
      %s71 = sadd.s32 %s41, %s37
      %s72 = ssub.s32 %s70, %s71
      %p73 = scmp.eq.s32.totalorder %s72, 0
      %s75 = sadd.s32 %s74, 1
      %s76 = scalar_select %p73, %s74, %s75
      %p79 = pneg %p73
      %p80 = scmp.eq.s32.totalorder %s22, 1
      %p81 = por %p79, %p80
      %p82 = scmp.ne.s32.totalorder %s74, %s77
      %p83 = scmp.eq.s32.totalorder %s22, 0
      %p84 = por %p82, %p83
      %p85 = scmp.ne.s32.totalorder %s74, %s77
      %p86 = scmp.eq.s32.totalorder %s27, 1
      %p87 = por %p85, %p86
      %p88 = scmp.ne.s32.totalorder %s77, %s78
      %p89 = scmp.eq.s32.totalorder %s27, 0
      %p90 = por %p88, %p89
      %p91 = scmp.ne.s32.totalorder %s77, %s78
      %p92 = scmp.eq.s32.totalorder %s28, 1
      %p93 = por %p91, %p92
      %p95 = scmp.ne.s32.totalorder %s78, %s94
      %p96 = scmp.eq.s32.totalorder %s28, 0
      %p97 = por %p95, %p96
      %s99 = sadd.s32 %s98, 1
      %p102 = scmp.eq.s32.totalorder %s22, 1
      %p103 = scmp.ne.s32.totalorder %s98, %s100
      %p104 = scmp.eq.s32.totalorder %s22, 0
      %p105 = por %p103, %p104
      %p106 = scmp.ne.s32.totalorder %s98, %s100
      %p107 = scmp.eq.s32.totalorder %s27, 1
      %p108 = por %p106, %p107
      %p109 = scmp.ne.s32.totalorder %s100, %s101
      %p110 = scmp.eq.s32.totalorder %s27, 0
      %p111 = por %p109, %p110
      %p112 = scmp.ne.s32.totalorder %s100, %s101
      %p113 = scmp.eq.s32.totalorder %s28, 1
      %p114 = por %p112, %p113
      %p116 = scmp.ne.s32.totalorder %s101, %s115
      %p117 = scmp.eq.s32.totalorder %s28, 0
      %p118 = por %p116, %p117
      %s120 = sadd.s32 %s119, 1
      %p123 = scmp.eq.s32.totalorder %s22, 1
      %p124 = scmp.ne.s32.totalorder %s119, %s121
      %p125 = scmp.eq.s32.totalorder %s22, 0
      %p126 = por %p124, %p125
      %p127 = scmp.ne.s32.totalorder %s119, %s121
      %p128 = scmp.eq.s32.totalorder %s27, 1
      %p129 = por %p127, %p128
      %p130 = scmp.ne.s32.totalorder %s121, %s122
      %p131 = scmp.eq.s32.totalorder %s27, 0
      %p132 = por %p130, %p131
      %p133 = scmp.ne.s32.totalorder %s121, %s122
      %p134 = scmp.eq.s32.totalorder %s28, 1
      %p135 = por %p133, %p134
      %p137 = scmp.ne.s32.totalorder %s122, %s136
      %p138 = scmp.eq.s32.totalorder %s28, 0
      %p139 = por %p137, %p138
      %s141 = sadd.s32 %s140, 1
      %p144 = scmp.eq.s32.totalorder %s22, 1
      %p145 = scmp.ne.s32.totalorder %s140, %s142
      %p146 = scmp.eq.s32.totalorder %s22, 0
      %p147 = por %p145, %p146
      %p148 = scmp.ne.s32.totalorder %s140, %s142
      %p149 = scmp.eq.s32.totalorder %s27, 1
      %p150 = por %p148, %p149
      %p151 = scmp.ne.s32.totalorder %s142, %s143
      %p152 = scmp.eq.s32.totalorder %s27, 0
      %p153 = por %p151, %p152
      %p154 = scmp.ne.s32.totalorder %s142, %s143
      %p155 = scmp.eq.s32.totalorder %s28, 1
      %p156 = por %p154, %p155
      %p158 = scmp.ne.s32.totalorder %s143, %s157
      %p159 = scmp.eq.s32.totalorder %s28, 0
      %p160 = por %p158, %p159
      %s162 = sadd.s32 %s161, 1
      %p165 = scmp.eq.s32.totalorder %s22, 1
      %p166 = scmp.ne.s32.totalorder %s161, %s163
      %p167 = scmp.eq.s32.totalorder %s22, 0
      %p168 = por %p166, %p167
      %p169 = scmp.ne.s32.totalorder %s161, %s163
      %p170 = scmp.eq.s32.totalorder %s27, 1
      %p171 = por %p169, %p170
      %p172 = scmp.ne.s32.totalorder %s163, %s164
      %p173 = scmp.eq.s32.totalorder %s27, 0
      %p174 = por %p172, %p173
      %p175 = scmp.ne.s32.totalorder %s163, %s164
      %p176 = scmp.eq.s32.totalorder %s28, 1
      %p177 = por %p175, %p176
      %p179 = scmp.ne.s32.totalorder %s164, %s178
      %p180 = scmp.eq.s32.totalorder %s28, 0
      %p181 = por %p179, %p180
      %s183 = sadd.s32 %s182, 1
      %p186 = scmp.eq.s32.totalorder %s22, 1
      %p187 = scmp.ne.s32.totalorder %s182, %s184
      %p188 = scmp.eq.s32.totalorder %s22, 0
      %p189 = por %p187, %p188
      %p190 = scmp.ne.s32.totalorder %s182, %s184
      %p191 = scmp.eq.s32.totalorder %s27, 1
      %p192 = por %p190, %p191
      %p193 = scmp.ne.s32.totalorder %s184, %s185
      %p194 = scmp.eq.s32.totalorder %s27, 0
      %p195 = por %p193, %p194
      %p196 = scmp.ne.s32.totalorder %s184, %s185
      %p197 = scmp.eq.s32.totalorder %s28, 1
      %p198 = por %p196, %p197
      %p200 = scmp.ne.s32.totalorder %s185, %s199
      %p201 = scmp.eq.s32.totalorder %s28, 0
      %p202 = por %p200, %p201
      %s204 = sadd.s32 %s203, 1
      %p207 = scmp.eq.s32.totalorder %s22, 1
      %p208 = scmp.ne.s32.totalorder %s203, %s205
      %p209 = scmp.eq.s32.totalorder %s22, 0
      %p210 = por %p208, %p209
      %p211 = scmp.ne.s32.totalorder %s203, %s205
      %p212 = scmp.eq.s32.totalorder %s27, 1
      %p213 = por %p211, %p212
      %p214 = scmp.ne.s32.totalorder %s205, %s206
      %p215 = scmp.eq.s32.totalorder %s27, 0
      %p216 = por %p214, %p215
      %p217 = scmp.ne.s32.totalorder %s205, %s206
      %p218 = scmp.eq.s32.totalorder %s28, 1
      %p219 = por %p217, %p218
      %p221 = scmp.ne.s32.totalorder %s206, %s220
      %p222 = scmp.eq.s32.totalorder %s28, 0
      %p223 = por %p221, %p222
      %s225 = sadd.s32 %s224, 1
      %p228 = scmp.eq.s32.totalorder %s22, 1
      %p229 = scmp.ne.s32.totalorder %s224, %s226
      %p230 = scmp.eq.s32.totalorder %s22, 0
      %p231 = por %p229, %p230
      %p232 = scmp.ne.s32.totalorder %s224, %s226
      %p233 = scmp.eq.s32.totalorder %s27, 1
      %p234 = por %p232, %p233
      %p235 = scmp.ne.s32.totalorder %s226, %s227
      %p236 = scmp.eq.s32.totalorder %s27, 0
      %p237 = por %p235, %p236
      %p238 = scmp.ne.s32.totalorder %s226, %s227
      %p239 = scmp.eq.s32.totalorder %s28, 1
      %p240 = por %p238, %p239
      %p242 = scmp.ne.s32.totalorder %s227, %s241
      %p243 = scmp.eq.s32.totalorder %s28, 0
      %p244 = por %p242, %p243
      %s246 = sadd.s32 %s245, 1
      %p249 = scmp.eq.s32.totalorder %s22, 1
      %p250 = scmp.ne.s32.totalorder %s245, %s247
      %p251 = scmp.eq.s32.totalorder %s22, 0
      %p252 = por %p250, %p251
      %p253 = scmp.ne.s32.totalorder %s245, %s247
      %p254 = scmp.eq.s32.totalorder %s27, 1
      %p255 = por %p253, %p254
      %p256 = scmp.ne.s32.totalorder %s247, %s248
      %p257 = scmp.eq.s32.totalorder %s27, 0
      %p258 = por %p256, %p257
      %p259 = scmp.ne.s32.totalorder %s247, %s248
      %p260 = scmp.eq.s32.totalorder %s28, 1
      %p261 = por %p259, %p260
      %p263 = scmp.ne.s32.totalorder %s248, %s262
      %p264 = scmp.eq.s32.totalorder %s28, 0
      %p265 = por %p263, %p264
      %s267 = sadd.s32 %s266, 1
      %p270 = scmp.eq.s32.totalorder %s22, 1
      %p271 = scmp.ne.s32.totalorder %s266, %s268
      %p272 = scmp.eq.s32.totalorder %s22, 0
      %p273 = por %p271, %p272
      %p274 = scmp.ne.s32.totalorder %s266, %s268
      %p275 = scmp.eq.s32.totalorder %s27, 1
      %p276 = por %p274, %p275
      %p277 = scmp.ne.s32.totalorder %s268, %s269
      %p278 = scmp.eq.s32.totalorder %s27, 0
      %p279 = por %p277, %p278
      %p280 = scmp.ne.s32.totalorder %s268, %s269
      %p281 = scmp.eq.s32.totalorder %s28, 1
      %p282 = por %p280, %p281
      %p284 = scmp.ne.s32.totalorder %s269, %s283
      %p285 = scmp.eq.s32.totalorder %s28, 0
      %p286 = por %p284, %p285
      %s288 = sadd.s32 %s287, 1
      %p291 = scmp.eq.s32.totalorder %s22, 1
      %p292 = scmp.ne.s32.totalorder %s287, %s289
      %p293 = scmp.eq.s32.totalorder %s22, 0
      %p294 = por %p292, %p293
      %p295 = scmp.ne.s32.totalorder %s287, %s289
      %p296 = scmp.eq.s32.totalorder %s27, 1
      %p297 = por %p295, %p296
      %p298 = scmp.ne.s32.totalorder %s289, %s290
      %p299 = scmp.eq.s32.totalorder %s27, 0
      %p300 = por %p298, %p299
      %p301 = scmp.ne.s32.totalorder %s289, %s290
      %p302 = scmp.eq.s32.totalorder %s28, 1
      %p303 = por %p301, %p302
      %p305 = scmp.ne.s32.totalorder %s290, %s304
      %p306 = scmp.eq.s32.totalorder %s28, 0
      %p307 = por %p305, %p306
      %s309 = sadd.s32 %s308, 1
      %p312 = scmp.eq.s32.totalorder %s22, 1
      %p313 = scmp.ne.s32.totalorder %s308, %s310
      %p314 = scmp.eq.s32.totalorder %s22, 0
      %p315 = por %p313, %p314
      %p316 = scmp.ne.s32.totalorder %s308, %s310
      %p317 = scmp.eq.s32.totalorder %s27, 1
      %p318 = por %p316, %p317
      %p319 = scmp.ne.s32.totalorder %s310, %s311
      %p320 = scmp.eq.s32.totalorder %s27, 0
      %p321 = por %p319, %p320
      %p322 = scmp.ne.s32.totalorder %s310, %s311
      %p323 = scmp.eq.s32.totalorder %s28, 1
      %p324 = por %p322, %p323
      %p326 = scmp.ne.s32.totalorder %s311, %s325
      %p327 = scmp.eq.s32.totalorder %s28, 0
      %p328 = por %p326, %p327
      %s329 = ssub.s32 %s29, %s41
      %s330 = ssub.s32 %s30, %s37
      %s331 = sor.u32 %s329, %s330
      %p332 = scmp.eq.s32.totalorder %s331, 0
      %s334 = sadd.s32 %s333, 1
      %s335 = scalar_select %p332, %s333, %s334
      %p338 = pneg %p332
      %p339 = scmp.eq.s32.totalorder %s22, 1
      %p340 = por %p338, %p339
      %p341 = scmp.ne.s32.totalorder %s333, %s336
      %p342 = scmp.eq.s32.totalorder %s22, 0
      %p343 = por %p341, %p342
      %p344 = scmp.ne.s32.totalorder %s333, %s336
      %p345 = scmp.eq.s32.totalorder %s27, 1
      %p346 = por %p344, %p345
      %p347 = scmp.ne.s32.totalorder %s336, %s337
      %p348 = scmp.eq.s32.totalorder %s27, 0
      %p349 = por %p347, %p348
      %p350 = scmp.ne.s32.totalorder %s336, %s337
      %p351 = scmp.eq.s32.totalorder %s28, 1
      %p352 = por %p350, %p351
      %p354 = scmp.ne.s32.totalorder %s337, %s353
      %p355 = scmp.eq.s32.totalorder %s28, 0
      %p356 = por %p354, %p355
      %p357 = scmp.le.s32.totalorder 1, %s22
      %p358 = scmp.lt.s32.totalorder %s22, 3
      %p359 = pnand %p357, %p358
      %p360 = pneg %p359
      // Predicated region
      $region9: #{pointnet_encoder_forward.3} parent=5 // pred_check
        _
      $region10: #{pointnet_encoder_forward.3} parent=5 // pred_check_branch
        %362 = sbr.rel (%p359) target = $region12
      $region11: #{pointnet_encoder_forward.3} parent=5 // pred_region
        %s363 = ssub.s32 %s22, 1
        // Predicated region
        $region13: #{pointnet_encoder_forward.3} parent=11 // pred_check
          %p364 = pneg %p111
        $region14: #{pointnet_encoder_forward.3} parent=11 // pred_check_branch
          %366 = sbr.rel (%p364) target = $region16
        $region15: #{pointnet_encoder_forward.3} parent=11 // pred_region
          _
        $region16: #{pointnet_encoder_forward.3} parent=11 // pred_fallthru
          _
        // Predicated region
        $region17: #{pointnet_encoder_forward.3} parent=11 // pred_check
          %p367 = pneg %p132
        $region18: #{pointnet_encoder_forward.3} parent=11 // pred_check_branch
          %369 = sbr.rel (%p367) target = $region20
        $region19: #{pointnet_encoder_forward.3} parent=11 // pred_region
          _
        $region20: #{pointnet_encoder_forward.3} parent=11 // pred_fallthru
          _
        // Predicated region
        $region21: #{pointnet_encoder_forward.3} parent=11 // pred_check
          %p370 = pneg %p153
        $region22: #{pointnet_encoder_forward.3} parent=11 // pred_check_branch
          %372 = sbr.rel (%p370) target = $region24
        $region23: #{pointnet_encoder_forward.3} parent=11 // pred_region
          _
        $region24: #{pointnet_encoder_forward.3} parent=11 // pred_fallthru
          _
        // Predicated region
        $region25: #{pointnet_encoder_forward.3} parent=11 // pred_check
          %p373 = pneg %p174
        $region26: #{pointnet_encoder_forward.3} parent=11 // pred_check_branch
          %375 = sbr.rel (%p373) target = $region28
        $region27: #{pointnet_encoder_forward.3} parent=11 // pred_region
          _
        $region28: #{pointnet_encoder_forward.3} parent=11 // pred_fallthru
          _
        // Predicated region
        $region29: #{pointnet_encoder_forward.3} parent=11 // pred_check
          %p376 = pneg %p195
        $region30: #{pointnet_encoder_forward.3} parent=11 // pred_check_branch
          %378 = sbr.rel (%p376) target = $region32
        $region31: #{pointnet_encoder_forward.3} parent=11 // pred_region
          _
        $region32: #{pointnet_encoder_forward.3} parent=11 // pred_fallthru
          _
        // Predicated region
        $region33: #{pointnet_encoder_forward.3} parent=11 // pred_check
          %p379 = pneg %p216
        $region34: #{pointnet_encoder_forward.3} parent=11 // pred_check_branch
          %381 = sbr.rel (%p379) target = $region36
        $region35: #{pointnet_encoder_forward.3} parent=11 // pred_region
          _
        $region36: #{pointnet_encoder_forward.3} parent=11 // pred_fallthru
          _
        // Predicated region
        $region37: #{pointnet_encoder_forward.3} parent=11 // pred_check
          %p382 = pneg %p237
        $region38: #{pointnet_encoder_forward.3} parent=11 // pred_check_branch
          %384 = sbr.rel (%p382) target = $region40
        $region39: #{pointnet_encoder_forward.3} parent=11 // pred_region
          _
        $region40: #{pointnet_encoder_forward.3} parent=11 // pred_fallthru
          _
        // Predicated region
        $region41: #{pointnet_encoder_forward.3} parent=11 // pred_check
          %p385 = pneg %p258
        $region42: #{pointnet_encoder_forward.3} parent=11 // pred_check_branch
          %387 = sbr.rel (%p385) target = $region44
        $region43: #{pointnet_encoder_forward.3} parent=11 // pred_region
          _
        $region44: #{pointnet_encoder_forward.3} parent=11 // pred_fallthru
          _
        // Predicated region
        $region45: #{pointnet_encoder_forward.3} parent=11 // pred_check
          %p388 = pneg %p279
        $region46: #{pointnet_encoder_forward.3} parent=11 // pred_check_branch
          %390 = sbr.rel (%p388) target = $region48
        $region47: #{pointnet_encoder_forward.3} parent=11 // pred_region
          _
        $region48: #{pointnet_encoder_forward.3} parent=11 // pred_fallthru
          _
        // Predicated region
        $region49: #{pointnet_encoder_forward.3} parent=11 // pred_check
          %p391 = pneg %p300
        $region50: #{pointnet_encoder_forward.3} parent=11 // pred_check_branch
          %393 = sbr.rel (%p391) target = $region52
        $region51: #{pointnet_encoder_forward.3} parent=11 // pred_region
          _
        $region52: #{pointnet_encoder_forward.3} parent=11 // pred_fallthru
          _
        // Predicated region
        $region53: #{pointnet_encoder_forward.3} parent=11 // pred_check
          %p394 = pneg %p321
        $region54: #{pointnet_encoder_forward.3} parent=11 // pred_check_branch
          %396 = sbr.rel (%p394) target = $region56
        $region55: #{pointnet_encoder_forward.3} parent=11 // pred_region
          _
        $region56: #{pointnet_encoder_forward.3} parent=11 // pred_fallthru
          _
      $region12: #{pointnet_encoder_forward.3} parent=5 // pred_fallthru
        _
      %p397 = scmp.lt.s32.totalorder %s22, 2
      // Predicated region
      $region57: #{pointnet_encoder_forward.3} parent=5 // pred_check
        %p398 = pneg %p397
      $region58: #{pointnet_encoder_forward.3} parent=5 // pred_check_branch
        %400 = sbr.rel (%p398) target = $region60
      $region59: #{pointnet_encoder_forward.3} parent=5 // pred_region
        // Predicated region
        $region61: #{pointnet_encoder_forward.3} parent=59 // pred_check
          %p401 = pneg %p56
        $region62: #{pointnet_encoder_forward.3} parent=59 // pred_check_branch
          %403 = sbr.rel (%p401) target = $region64
        $region63: #{pointnet_encoder_forward.3} parent=59 // pred_region
          %s404 = sadd.s32 %s29, %s30
          %s405 = smul.u32 8, %s404
          %p406 = scmp.lt.s32.totalorder %s405, 15
          %s407 = scalar_select %p406, %s405, 15
          %s408 = smul.addr %s407, 4
          %s409 = scalar_lea.vmem %s0, %s408
          %s410 = sadd.s32 %s29, %s30
          %s411 = smul.u32 8, %s410
        $region64: #{pointnet_encoder_forward.3} parent=59 // pred_fallthru
          _
        // Predicated region
        $region65: #{pointnet_encoder_forward.3} parent=59 // pred_check
          %p412 = pneg %p84
        $region66: #{pointnet_encoder_forward.3} parent=59 // pred_check_branch
          %414 = sbr.rel (%p412) target = $region68
        $region67: #{pointnet_encoder_forward.3} parent=59 // pred_region
          %s415 = sadd.s32 %s29, %s30
          %s416 = smul.u32 8, %s415
          %p417 = scmp.lt.s32.totalorder %s416, 15
          %s418 = scalar_select %p417, %s416, 15
          %s419 = smul.addr %s418, 4
          %s420 = scalar_lea.vmem %s1, %s419
          %s421 = sadd.s32 %s29, %s30
          %s422 = smul.u32 8, %s421
        $region68: #{pointnet_encoder_forward.3} parent=59 // pred_fallthru
          _
      $region60: #{pointnet_encoder_forward.3} parent=5 // pred_fallthru
        _
      %p423 = scmp.le.s32.totalorder 1, %s22
      %p424 = scmp.lt.s32.totalorder %s22, 3
      %p425 = pnand %p423, %p424
      %p426 = pneg %p425
      // Predicated region
      $region69: #{pointnet_encoder_forward.3} parent=5 // pred_check
        _
      $region70: #{pointnet_encoder_forward.3} parent=5 // pred_check_branch
        %428 = sbr.rel (%p425) target = $region72
      $region71: #{pointnet_encoder_forward.3} parent=5 // pred_region
        %s429 = ssub.s32 %s22, 1
        %s430 = sadd.s32 %s31, %s32
        %s431 = smul.u32 8, %s430
        %p432 = scmp.lt.s32.totalorder %s431, 15
        %s433 = scalar_select %p432, %s431, 15
        %s434 = smul.addr %s433, 4
        %s435 = scalar_lea.vmem %s0, %s434
        %p436 = pneg %p62
        %p437 = pneg %p59
        %s438 = sadd.s32 %s31, %s32
        %s439 = smul.u32 8, %s438
        %p440 = scmp.lt.s32.totalorder %s439, 15
        %s441 = scalar_select %p440, %s439, 15
        %s442 = smul.addr %s441, 4
        %s443 = scalar_lea.vmem %s1, %s442
        %p444 = pneg %p90
        %p445 = pneg %p87
        %p446 = pneg %p111
        %p447 = pneg %p108
        %p448 = pneg %p132
        %p449 = pneg %p129
        %p450 = pneg %p153
        %p451 = pneg %p150
        %p452 = pneg %p174
        %p453 = pneg %p171
        %p454 = pneg %p195
        %p455 = pneg %p192
        %p456 = pneg %p216
        %p457 = pneg %p213
        %p458 = pneg %p237
        %p459 = pneg %p234
        %p460 = pneg %p258
        %p461 = pneg %p255
        %p462 = pneg %p279
        %p463 = pneg %p276
        %p464 = pneg %p300
        %p465 = pneg %p297
        %p466 = pneg %p321
        %p467 = pneg %p318
        %p468 = pneg %p349
        %p469 = pneg %p346
        %s470 = sand.u32 %s336, 1
        %s471 = scalar_lea.sflag [#allocation3], %s470
        %s472 = sand.u32 %s336, 1
        %s473 = smul.addr %s472, 32
        %s474 = scalar_lea.vmem [#allocation2], %s473
        %s475 = sadd.s32 %s31, %s32
        %s476 = smul.u32 8, %s475
        %p477 = scmp.lt.s32.totalorder %s476, 15
        %s478 = scalar_select %p477, %s476, 15
        %s479 = smul.addr %s478, 4
        %s480 = scalar_lea.vmem %s0, %s479
        %s481 = sadd.s32 %s31, %s32
        %s482 = smul.u32 8, %s481
        %s483 = sadd.s32 %s31, %s32
        %s484 = smul.u32 8, %s483
        %p485 = scmp.lt.s32.totalorder %s484, 15
        %s486 = scalar_select %p485, %s484, 15
        %s487 = smul.addr %s486, 4
        %s488 = scalar_lea.vmem %s1, %s487
        %s489 = sadd.s32 %s31, %s32
        %s490 = smul.u32 8, %s489
        %v492 = vld [vmem:[%s2] sm:$0x3]
        %v493 = vld [vmem:[%s3] sm:$0xf]
        %v494 = vld [vmem:[%s3 + $0x4] sm:$0xf]
        %v495 = vld [vmem:[%s3 + $0x8] sm:$0xf]
        %v496 = vld [vmem:[%s3 + $0xc] sm:$0xf]
        %v497 = vld [vmem:[%s3 + $0x10] sm:$0xf]
        %v498 = vld [vmem:[%s3 + $0x14] sm:$0xf]
        %v499 = vld [vmem:[%s3 + $0x18] sm:$0xf]
        %v500 = vld [vmem:[%s3 + $0x1c] sm:$0xf]
        %v501 = vld [vmem:[%s4] sm:$0x1]
        %v502 = vld [vmem:[%s480] sm:$0xf]
        %v503 = vld [vmem:[%s480 + $0x4] sm:$0xf]
        %v504 = vld [vmem:[%s480 + $0x8] sm:$0xf]
        %v505 = vld [vmem:[%s480 + $0xc] sm:$0xf]
        %v506 = vld [vmem:[%s480 + $0x10] sm:$0xf]
        %v507 = vld [vmem:[%s480 + $0x14] sm:$0xf]
        %v508 = vld [vmem:[%s480 + $0x18] sm:$0xf]
        %v509 = vld [vmem:[%s480 + $0x1c] sm:$0xf]
        %v510 = vld [vmem:[%s488] sm:$0xf]
        %v511 = vld [vmem:[%s488 + $0x4] sm:$0xf]
        %v512 = vld [vmem:[%s488 + $0x8] sm:$0xf]
        %v513 = vld [vmem:[%s488 + $0xc] sm:$0xf]
        %v514 = vld [vmem:[%s488 + $0x10] sm:$0xf]
        %v515 = vld [vmem:[%s488 + $0x14] sm:$0xf]
        %v516 = vld [vmem:[%s488 + $0x18] sm:$0xf]
        %v517 = vld [vmem:[%s488 + $0x1c] sm:$0xf]
        %v526 = vunpack.c.l.b16 %v510
        %v527 = vunpack.c.l.b16 %v511
        %v528 = vunpack.c.l.b16 %v512
        %v529 = vunpack.c.l.b16 %v513
        %v530 = vunpack.c.l.b16 %v514
        %v531 = vunpack.c.l.b16 %v515
        %v532 = vunpack.c.l.b16 %v516
        %v533 = vunpack.c.l.b16 %v517
        %v534 = vpack.c.b16 %v527, %v526
        %v535 = vpack.c.b16 %v529, %v528
        %v536 = vpack.c.b16 %v531, %v530
        %v537 = vpack.c.b16 %v533, %v532
        %v546 = vunpack.c.l.b16 %v493
        %v547 = vunpack.c.l.b16 %v494
        %v548 = vunpack.c.l.b16 %v495
        %v549 = vunpack.c.l.b16 %v496
        %v550 = vunpack.c.l.b16 %v497
        %v551 = vunpack.c.l.b16 %v498
        %v552 = vunpack.c.l.b16 %v499
        %v553 = vunpack.c.l.b16 %v500
        %v554 = vpack.c.b16 %v547, %v546
        %v555 = vpack.c.b16 %v549, %v548
        %v556 = vpack.c.b16 %v551, %v550
        %v557 = vpack.c.b16 %v553, %v552
        %vm562 = vcmask 523264
        %v564 = vsel %vm562, %v534, 0
        %v567 = vsel %vm562, %v535, 0
        %v570 = vsel %vm562, %v536, 0
        %v573 = vsel %vm562, %v537, 0
        %575 = vmatprep.subr.bf16.mxu0 0
        %576 = vmatpush1.bf16.msra.mxu0 %v554
        %577 = vmatprep.subr.bf16.mxu0 0
        %578 = vmatpush1.bf16.msra.mxu0 %v555
        %579 = vmatprep.subr.bf16.mxu0 0
        %580 = vmatpush1.bf16.msra.mxu0 %v556
        %581 = vmatprep.subr.bf16.mxu0 0
        %582 = vmatpush1.bf16.msra.mxu0 %v557
        %583 = vmatprep.subr.bf16.mxu0 0
        %584 = vmatpush1.bf16.msra.mxu0 0
        %585 = vmatprep.subr.bf16.mxu0 0
        %586 = vmatpush1.bf16.msra.mxu0 0
        %587 = vmatprep.subr.bf16.mxu0 0
        %588 = vmatpush1.bf16.msra.mxu0 0
        %589 = vmatprep.subr.bf16.mxu0 0
        %590 = vmatpush1.bf16.msra.mxu0 0
        %591 = vmatprep.subr.bf16.mxu0 0
        %592 = vmatpush1.bf16.msra.mxu0 0
        %593 = vmatprep.subr.bf16.mxu0 0
        %594 = vmatpush1.bf16.msra.mxu0 0
        %595 = vmatprep.subr.bf16.mxu0 0
        %596 = vmatpush1.bf16.msra.mxu0 0
        %597 = vmatprep.subr.bf16.mxu0 0
        %598 = vmatpush1.bf16.msra.mxu0 0
        %599 = vmatprep.subr.bf16.mxu0 0
        %600 = vmatpush1.bf16.msra.mxu0 0
        %601 = vmatprep.subr.bf16.mxu0 0
        %602 = vmatpush1.bf16.msra.mxu0 0
        %603 = vmatprep.subr.bf16.mxu0 0
        %604 = vmatpush1.bf16.msra.mxu0 0
        %605 = vmatprep.subr.bf16.mxu0 0
        %606 = vmatpush1.bf16.msra.mxu0 0
        %607 = vmatprep.mubr.bf16.mxu0 0
        %608 = vmatmul.mubr.bf16.gmra.mrb[0].mxu0 %v564
        %v609 = vpop.f32.mrb[0].mxu0
        %v610 = vadd.f32 0.0, %v609
        %v611 = vpop.f32.mrb[0].mxu0
        %v612 = vpop.f32.mrb[0].mxu0
        %v613 = vadd.f32 0.0, %v612
        %v614 = vpop.f32.mrb[0].mxu0
        %615 = vmatprep.mubr.bf16.mxu0 0
        %616 = vmatmul.mubr.bf16.gmra.mrb[0].mxu0 %v567
        %v617 = vpop.f32.mrb[0].mxu0
        %v618 = vadd.f32 0.0, %v617
        %v619 = vpop.f32.mrb[0].mxu0
        %v620 = vpop.f32.mrb[0].mxu0
        %v621 = vadd.f32 0.0, %v620
        %v622 = vpop.f32.mrb[0].mxu0
        %623 = vmatprep.mubr.bf16.mxu0 0
        %624 = vmatmul.mubr.bf16.gmra.mrb[0].mxu0 %v570
        %v625 = vpop.f32.mrb[0].mxu0
        %v626 = vadd.f32 0.0, %v625
        %v627 = vpop.f32.mrb[0].mxu0
        %v628 = vpop.f32.mrb[0].mxu0
        %v629 = vadd.f32 0.0, %v628
        %v630 = vpop.f32.mrb[0].mxu0
        %631 = vmatprep.mubr.bf16.mxu0 0
        %632 = vmatmul.mubr.bf16.gmra.mrb[0].mxu0 %v573
        %v633 = vpop.f32.mrb[0].mxu0
        %v634 = vadd.f32 0.0, %v633
        %v635 = vpop.f32.mrb[0].mxu0
        %v636 = vpop.f32.mrb[0].mxu0
        %v637 = vadd.f32 0.0, %v636
        %v638 = vpop.f32.mrb[0].mxu0
        %639 = vdwg.mxu0
        %v648 = vunpack.c.l.b16 %v502
        %v649 = vunpack.c.l.b16 %v503
        %v650 = vunpack.c.l.b16 %v504
        %v651 = vunpack.c.l.b16 %v505
        %v652 = vunpack.c.l.b16 %v506
        %v653 = vunpack.c.l.b16 %v507
        %v654 = vunpack.c.l.b16 %v508
        %v655 = vunpack.c.l.b16 %v509
        %v656 = vpack.c.b16 %v649, %v648
        %v657 = vpack.c.b16 %v651, %v650
        %v658 = vpack.c.b16 %v653, %v652
        %v659 = vpack.c.b16 %v655, %v654
        %vm660 = vcmask 31744
        %v662 = vsel %vm660, %v656, 0
        %v665 = vsel %vm660, %v657, 0
        %v668 = vsel %vm660, %v658, 0
        %v671 = vsel %vm660, %v659, 0
        %vm673 = vcmask 1041408
        %v675 = vsel %vm673, %v492, 0
        %677 = vmatprep.subr.bf16.mxu0 0
        %678 = vmatpush1.bf16.msra.mxu0 %v675
        %679 = vmatprep.subr.bf16.mxu0 0
        %680 = vmatpush1.bf16.msra.mxu0 0
        %681 = vmatprep.subr.bf16.mxu0 0
        %682 = vmatpush1.bf16.msra.mxu0 0
        %683 = vmatprep.subr.bf16.mxu0 0
        %684 = vmatpush1.bf16.msra.mxu0 0
        %685 = vmatprep.subr.bf16.mxu0 0
        %686 = vmatpush1.bf16.msra.mxu0 0
        %687 = vmatprep.subr.bf16.mxu0 0
        %688 = vmatpush1.bf16.msra.mxu0 0
        %689 = vmatprep.subr.bf16.mxu0 0
        %690 = vmatpush1.bf16.msra.mxu0 0
        %691 = vmatprep.subr.bf16.mxu0 0
        %692 = vmatpush1.bf16.msra.mxu0 0
        %693 = vmatprep.subr.bf16.mxu0 0
        %694 = vmatpush1.bf16.msra.mxu0 0
        %695 = vmatprep.subr.bf16.mxu0 0
        %696 = vmatpush1.bf16.msra.mxu0 0
        %697 = vmatprep.subr.bf16.mxu0 0
        %698 = vmatpush1.bf16.msra.mxu0 0
        %699 = vmatprep.subr.bf16.mxu0 0
        %700 = vmatpush1.bf16.msra.mxu0 0
        %701 = vmatprep.subr.bf16.mxu0 0
        %702 = vmatpush1.bf16.msra.mxu0 0
        %703 = vmatprep.subr.bf16.mxu0 0
        %704 = vmatpush1.bf16.msra.mxu0 0
        %705 = vmatprep.subr.bf16.mxu0 0
        %706 = vmatpush1.bf16.msra.mxu0 0
        %707 = vmatprep.subr.bf16.mxu0 0
        %708 = vmatpush1.bf16.msra.mxu0 0
        %709 = vmatprep.mubr.bf16.mxu0 0
        %710 = vmatmul.mubr.bf16.gmra.mrb[0].mxu0 %v662
        %v711 = vpop.f32.mrb[0].mxu0
        %v712 = vadd.f32 %v610, %v711
        %v713 = vpop.f32.mrb[0].mxu0
        %v714 = vpop.f32.mrb[0].mxu0
        %v715 = vadd.f32 %v613, %v714
        %v716 = vpop.f32.mrb[0].mxu0
        %717 = vmatprep.mubr.bf16.mxu0 0
        %718 = vmatmul.mubr.bf16.gmra.mrb[0].mxu0 %v665
        %v719 = vpop.f32.mrb[0].mxu0
        %v720 = vadd.f32 %v618, %v719
        %v721 = vpop.f32.mrb[0].mxu0
        %v722 = vpop.f32.mrb[0].mxu0
        %v723 = vadd.f32 %v621, %v722
        %v724 = vpop.f32.mrb[0].mxu0
        %725 = vmatprep.mubr.bf16.mxu0 0
        %726 = vmatmul.mubr.bf16.gmra.mrb[0].mxu0 %v668
        %v727 = vpop.f32.mrb[0].mxu0
        %v728 = vadd.f32 %v626, %v727
        %v729 = vpop.f32.mrb[0].mxu0
        %v730 = vpop.f32.mrb[0].mxu0
        %v731 = vadd.f32 %v629, %v730
        %v732 = vpop.f32.mrb[0].mxu0
        %733 = vmatprep.mubr.bf16.mxu0 0
        %734 = vmatmul.mubr.bf16.gmra.mrb[0].mxu0 %v671
        %v735 = vpop.f32.mrb[0].mxu0
        %v736 = vadd.f32 %v634, %v735
        %v737 = vpop.f32.mrb[0].mxu0
        %v738 = vpop.f32.mrb[0].mxu0
        %v739 = vadd.f32 %v637, %v738
        %v740 = vpop.f32.mrb[0].mxu0
        %741 = vdwg.mxu0
        %v743 = vlaneseq
        %v744 = vshrl.u32 %v743, 7
        %v745 = vsub.s32 0, %v744
        %v746 = vrot.slane %v501, %v745
        %v748 = vadd.f32 %v712, %v746
        %v749 = vadd.f32 %v715, %v746
        %v750 = vadd.f32 %v720, %v746
        %v751 = vadd.f32 %v723, %v746
        %v752 = vadd.f32 %v728, %v746
        %v753 = vadd.f32 %v731, %v746
        %v754 = vadd.f32 %v736, %v746
        %v755 = vadd.f32 %v739, %v746
        %v756 = vmax.f32 %v748, 0.0
        %v757 = vmax.f32 %v749, 0.0
        %v758 = vmax.f32 %v750, 0.0
        %v759 = vmax.f32 %v751, 0.0
        %v760 = vmax.f32 %v752, 0.0
        %v761 = vmax.f32 %v753, 0.0
        %v762 = vmax.f32 %v754, 0.0
        %v763 = vmax.f32 %v755, 0.0
        %v764 = vpack.c.bf16 %v757, %v756
        %v765 = vpack.c.bf16 %v759, %v758
        %v766 = vpack.c.bf16 %v761, %v760
        %v767 = vpack.c.bf16 %v763, %v762
        %v768 = vld [vmem:[%s5] sm:$0xf]
        %v769 = vld [vmem:[%s5 + $0x4] sm:$0xf]
        %v770 = vld [vmem:[%s5 + $0x8] sm:$0xf]
        %v771 = vld [vmem:[%s5 + $0xc] sm:$0xf]
        %v772 = vld [vmem:[%s5 + $0x10] sm:$0xf]
        %v773 = vld [vmem:[%s5 + $0x14] sm:$0xf]
        %v774 = vld [vmem:[%s5 + $0x18] sm:$0xf]
        %v775 = vld [vmem:[%s5 + $0x1c] sm:$0xf]
        %v776 = vld [vmem:[%s5 + $0x20] sm:$0xf]
        %v777 = vld [vmem:[%s5 + $0x24] sm:$0xf]
        %v778 = vld [vmem:[%s5 + $0x28] sm:$0xf]
        %v779 = vld [vmem:[%s5 + $0x2c] sm:$0xf]
        %v780 = vld [vmem:[%s5 + $0x30] sm:$0xf]
        %v781 = vld [vmem:[%s5 + $0x34] sm:$0xf]
        %v782 = vld [vmem:[%s5 + $0x38] sm:$0xf]
        %v783 = vld [vmem:[%s5 + $0x3c] sm:$0xf]
        %v784 = vld [vmem:[%s6] sm:$0x1]
        %v786 = vlaneseq
        %v787 = vshrl.u32 %v786, 7
        %v788 = vsub.s32 0, %v787
        %v789 = vrot.slane %v784, %v788
        %v807 = vunpack.c.l.b16 %v768
        %v808 = vunpack.c.l.b16 %v769
        %v809 = vunpack.c.l.b16 %v770
        %v810 = vunpack.c.l.b16 %v771
        %v811 = vunpack.c.l.b16 %v772
        %v812 = vunpack.c.l.b16 %v773
        %v813 = vunpack.c.l.b16 %v774
        %v814 = vunpack.c.l.b16 %v775
        %v815 = vunpack.c.l.b16 %v776
        %v816 = vunpack.c.l.b16 %v777
        %v817 = vunpack.c.l.b16 %v778
        %v818 = vunpack.c.l.b16 %v779
        %v819 = vunpack.c.l.b16 %v780
        %v820 = vunpack.c.l.b16 %v781
        %v821 = vunpack.c.l.b16 %v782
        %v822 = vunpack.c.l.b16 %v783
        %v823 = vpack.c.b16 %v808, %v807
        %v824 = vpack.c.b16 %v810, %v809
        %v825 = vpack.c.b16 %v812, %v811
        %v826 = vpack.c.b16 %v814, %v813
        %v827 = vpack.c.b16 %v816, %v815
        %v828 = vpack.c.b16 %v818, %v817
        %v829 = vpack.c.b16 %v820, %v819
        %v830 = vpack.c.b16 %v822, %v821
        %839 = vmatprep.subr.bf16.mxu0 0
        %840 = vmatpush1.bf16.msra.mxu0 %v823
        %841 = vmatprep.subr.bf16.mxu0 0
        %842 = vmatpush1.bf16.msra.mxu0 %v824
        %843 = vmatprep.subr.bf16.mxu0 0
        %844 = vmatpush1.bf16.msra.mxu0 %v825
        %845 = vmatprep.subr.bf16.mxu0 0
        %846 = vmatpush1.bf16.msra.mxu0 %v826
        %847 = vmatprep.subr.bf16.mxu0 0
        %848 = vmatpush1.bf16.msra.mxu0 %v827
        %849 = vmatprep.subr.bf16.mxu0 0
        %850 = vmatpush1.bf16.msra.mxu0 %v828
        %851 = vmatprep.subr.bf16.mxu0 0
        %852 = vmatpush1.bf16.msra.mxu0 %v829
        %853 = vmatprep.subr.bf16.mxu0 0
        %854 = vmatpush1.bf16.msra.mxu0 %v830
        %855 = vmatprep.subr.bf16.mxu0 0
        %856 = vmatpush1.bf16.msra.mxu0 0
        %857 = vmatprep.subr.bf16.mxu0 0
        %858 = vmatpush1.bf16.msra.mxu0 0
        %859 = vmatprep.subr.bf16.mxu0 0
        %860 = vmatpush1.bf16.msra.mxu0 0
        %861 = vmatprep.subr.bf16.mxu0 0
        %862 = vmatpush1.bf16.msra.mxu0 0
        %863 = vmatprep.subr.bf16.mxu0 0
        %864 = vmatpush1.bf16.msra.mxu0 0
        %865 = vmatprep.subr.bf16.mxu0 0
        %866 = vmatpush1.bf16.msra.mxu0 0
        %867 = vmatprep.subr.bf16.mxu0 0
        %868 = vmatpush1.bf16.msra.mxu0 0
        %869 = vmatprep.subr.bf16.mxu0 0
        %870 = vmatpush1.bf16.msra.mxu0 0
        %871 = vmatprep.mubr.bf16.mxu0 0
        %872 = vmatmul.mubr.bf16.gmra.mrb[0].mxu0 %v764
        %v873 = vpop.f32.mrb[0].mxu0
        %v874 = vadd.f32 %v789, %v873
        %v875 = vpop.f32.mrb[0].mxu0
        %v876 = vpop.f32.mrb[0].mxu0
        %v877 = vadd.f32 %v789, %v876
        %v878 = vpop.f32.mrb[0].mxu0
        %879 = vmatprep.mubr.bf16.mxu0 0
        %880 = vmatmul.mubr.bf16.gmra.mrb[0].mxu0 %v765
        %v881 = vpop.f32.mrb[0].mxu0
        %v882 = vadd.f32 %v789, %v881
        %v883 = vpop.f32.mrb[0].mxu0
        %v884 = vpop.f32.mrb[0].mxu0
        %v885 = vadd.f32 %v789, %v884
        %v886 = vpop.f32.mrb[0].mxu0
        %887 = vmatprep.mubr.bf16.mxu0 0
        %888 = vmatmul.mubr.bf16.gmra.mrb[0].mxu0 %v766
        %v889 = vpop.f32.mrb[0].mxu0
        %v890 = vadd.f32 %v789, %v889
        %v891 = vpop.f32.mrb[0].mxu0
        %v892 = vpop.f32.mrb[0].mxu0
        %v893 = vadd.f32 %v789, %v892
        %v894 = vpop.f32.mrb[0].mxu0
        %895 = vmatprep.mubr.bf16.mxu0 0
        %896 = vmatmul.mubr.bf16.gmra.mrb[0].mxu0 %v767
        %v897 = vpop.f32.mrb[0].mxu0
        %v898 = vadd.f32 %v789, %v897
        %v899 = vpop.f32.mrb[0].mxu0
        %v900 = vpop.f32.mrb[0].mxu0
        %v901 = vadd.f32 %v789, %v900
        %v902 = vpop.f32.mrb[0].mxu0
        %903 = vdwg.mxu0
        %v904 = vmax.f32 %v874, 0.0
        %v905 = vmax.f32 %v877, 0.0
        %v906 = vmax.f32 %v882, 0.0
        %v907 = vmax.f32 %v885, 0.0
        %v908 = vmax.f32 %v890, 0.0
        %v909 = vmax.f32 %v893, 0.0
        %v910 = vmax.f32 %v898, 0.0
        %v911 = vmax.f32 %v901, 0.0
        %v912 = vpack.c.bf16 %v905, %v904
        %v913 = vpack.c.bf16 %v907, %v906
        %v914 = vpack.c.bf16 %v909, %v908
        %v915 = vpack.c.bf16 %v911, %v910
        %v916 = vld [vmem:[%s7] sm:$0xff]
        %v917 = vld [vmem:[%s7 + $0x8] sm:$0xff]
        %v918 = vld [vmem:[%s7 + $0x10] sm:$0xff]
        %v919 = vld [vmem:[%s7 + $0x18] sm:$0xff]
        %v920 = vld [vmem:[%s7 + $0x20] sm:$0xff]
        %v921 = vld [vmem:[%s7 + $0x28] sm:$0xff]
        %v922 = vld [vmem:[%s7 + $0x30] sm:$0xff]
        %v923 = vld [vmem:[%s7 + $0x38] sm:$0xff]
        %v924 = vld [vmem:[%s7 + $0x40] sm:$0xff]
        %v925 = vld [vmem:[%s7 + $0x48] sm:$0xff]
        %v926 = vld [vmem:[%s7 + $0x50] sm:$0xff]
        %v927 = vld [vmem:[%s7 + $0x58] sm:$0xff]
        %v928 = vld [vmem:[%s7 + $0x60] sm:$0xff]
        %v929 = vld [vmem:[%s7 + $0x68] sm:$0xff]
        %v930 = vld [vmem:[%s7 + $0x70] sm:$0xff]
        %v931 = vld [vmem:[%s7 + $0x78] sm:$0xff]
        %v932 = vld [vmem:[%s8] sm:$0x3]
        %v934 = vlaneseq
        %v935 = vshrl.u32 %v934, 7
        %v936 = vsub.s32 0, %v935
        %v937 = vrot.slane %v932, %v936
        %v938 = vlaneseq
        %v939 = vshrl.u32 %v938, 7
        %v940 = vsub.s32 1, %v939
        %v941 = vrot.slane %v932, %v940
        %v960 = vunpack.c.l.b16 %v916
        %v961 = vunpack.c.h.b16 %v916
        %v962 = vunpack.c.l.b16 %v917
        %v963 = vunpack.c.h.b16 %v917
        %v964 = vunpack.c.l.b16 %v918
        %v965 = vunpack.c.h.b16 %v918
        %v966 = vunpack.c.l.b16 %v919
        %v967 = vunpack.c.h.b16 %v919
        %v968 = vunpack.c.l.b16 %v920
        %v969 = vunpack.c.h.b16 %v920
        %v970 = vunpack.c.l.b16 %v921
        %v971 = vunpack.c.h.b16 %v921
        %v972 = vunpack.c.l.b16 %v922
        %v973 = vunpack.c.h.b16 %v922
        %v974 = vunpack.c.l.b16 %v923
        %v975 = vunpack.c.h.b16 %v923
        %v976 = vunpack.c.l.b16 %v924
        %v977 = vunpack.c.h.b16 %v924
        %v978 = vunpack.c.l.b16 %v925
        %v979 = vunpack.c.h.b16 %v925
        %v980 = vunpack.c.l.b16 %v926
        %v981 = vunpack.c.h.b16 %v926
        %v982 = vunpack.c.l.b16 %v927
        %v983 = vunpack.c.h.b16 %v927
        %v984 = vunpack.c.l.b16 %v928
        %v985 = vunpack.c.h.b16 %v928
        %v986 = vunpack.c.l.b16 %v929
        %v987 = vunpack.c.h.b16 %v929
        %v988 = vunpack.c.l.b16 %v930
        %v989 = vunpack.c.h.b16 %v930
        %v990 = vunpack.c.l.b16 %v931
        %v991 = vunpack.c.h.b16 %v931
        %v992 = vpack.c.b16 %v962, %v960
        %v993 = vpack.c.b16 %v963, %v961
        %v994 = vpack.c.b16 %v966, %v964
        %v995 = vpack.c.b16 %v967, %v965
        %v996 = vpack.c.b16 %v970, %v968
        %v997 = vpack.c.b16 %v971, %v969
        %v998 = vpack.c.b16 %v974, %v972
        %v999 = vpack.c.b16 %v975, %v973
        %v1000 = vpack.c.b16 %v978, %v976
        %v1001 = vpack.c.b16 %v979, %v977
        %v1002 = vpack.c.b16 %v982, %v980
        %v1003 = vpack.c.b16 %v983, %v981
        %v1004 = vpack.c.b16 %v986, %v984
        %v1005 = vpack.c.b16 %v987, %v985
        %v1006 = vpack.c.b16 %v990, %v988
        %v1007 = vpack.c.b16 %v991, %v989
        %1024 = vmatprep.subr.bf16.mxu0 %v993
        %1025 = vmatpush1.bf16.msra.mxu0 %v992
        %1026 = vmatprep.subr.bf16.mxu0 %v995
        %1027 = vmatpush1.bf16.msra.mxu0 %v994
        %1028 = vmatprep.subr.bf16.mxu0 %v997
        %1029 = vmatpush1.bf16.msra.mxu0 %v996
        %1030 = vmatprep.subr.bf16.mxu0 %v999
        %1031 = vmatpush1.bf16.msra.mxu0 %v998
        %1032 = vmatprep.subr.bf16.mxu0 %v1001
        %1033 = vmatpush1.bf16.msra.mxu0 %v1000
        %1034 = vmatprep.subr.bf16.mxu0 %v1003
        %1035 = vmatpush1.bf16.msra.mxu0 %v1002
        %1036 = vmatprep.subr.bf16.mxu0 %v1005
        %1037 = vmatpush1.bf16.msra.mxu0 %v1004
        %1038 = vmatprep.subr.bf16.mxu0 %v1007
        %1039 = vmatpush1.bf16.msra.mxu0 %v1006
        %1040 = vmatprep.subr.bf16.mxu0 0
        %1041 = vmatpush1.bf16.msra.mxu0 0
        %1042 = vmatprep.subr.bf16.mxu0 0
        %1043 = vmatpush1.bf16.msra.mxu0 0
        %1044 = vmatprep.subr.bf16.mxu0 0
        %1045 = vmatpush1.bf16.msra.mxu0 0
        %1046 = vmatprep.subr.bf16.mxu0 0
        %1047 = vmatpush1.bf16.msra.mxu0 0
        %1048 = vmatprep.subr.bf16.mxu0 0
        %1049 = vmatpush1.bf16.msra.mxu0 0
        %1050 = vmatprep.subr.bf16.mxu0 0
        %1051 = vmatpush1.bf16.msra.mxu0 0
        %1052 = vmatprep.subr.bf16.mxu0 0
        %1053 = vmatpush1.bf16.msra.mxu0 0
        %1054 = vmatprep.subr.bf16.mxu0 0
        %1055 = vmatpush1.bf16.msra.mxu0 0
        %1056 = vmatprep.mubr.bf16.mxu0 0
        %1057 = vmatmul.mubr.bf16.gmra.mrb[0].mxu0 %v912
        %v1058 = vpop.f32.mrb[0].mxu0
        %v1059 = vadd.f32 %v937, %v1058
        %v1060 = vpop.f32.mrb[0].mxu0
        %v1061 = vadd.f32 %v941, %v1060
        %v1062 = vpop.f32.mrb[0].mxu0
        %v1063 = vadd.f32 %v937, %v1062
        %v1064 = vpop.f32.mrb[0].mxu0
        %v1065 = vadd.f32 %v941, %v1064
        %1066 = vmatprep.mubr.bf16.mxu0 0
        %1067 = vmatmul.mubr.bf16.gmra.mrb[0].mxu0 %v913
        %v1068 = vpop.f32.mrb[0].mxu0
        %v1069 = vadd.f32 %v937, %v1068
        %v1070 = vpop.f32.mrb[0].mxu0
        %v1071 = vadd.f32 %v941, %v1070
        %v1072 = vpop.f32.mrb[0].mxu0
        %v1073 = vadd.f32 %v937, %v1072
        %v1074 = vpop.f32.mrb[0].mxu0
        %v1075 = vadd.f32 %v941, %v1074
        %1076 = vmatprep.mubr.bf16.mxu0 0
        %1077 = vmatmul.mubr.bf16.gmra.mrb[0].mxu0 %v914
        %v1078 = vpop.f32.mrb[0].mxu0
        %v1079 = vadd.f32 %v937, %v1078
        %v1080 = vpop.f32.mrb[0].mxu0
        %v1081 = vadd.f32 %v941, %v1080
        %v1082 = vpop.f32.mrb[0].mxu0
        %v1083 = vadd.f32 %v937, %v1082
        %v1084 = vpop.f32.mrb[0].mxu0
        %v1085 = vadd.f32 %v941, %v1084
        %1086 = vmatprep.mubr.bf16.mxu0 0
        %1087 = vmatmul.mubr.bf16.gmra.mrb[0].mxu0 %v915
        %v1088 = vpop.f32.mrb[0].mxu0
        %v1089 = vadd.f32 %v937, %v1088
        %v1090 = vpop.f32.mrb[0].mxu0
        %v1091 = vadd.f32 %v941, %v1090
        %v1092 = vpop.f32.mrb[0].mxu0
        %v1093 = vadd.f32 %v937, %v1092
        %v1094 = vpop.f32.mrb[0].mxu0
        %v1095 = vadd.f32 %v941, %v1094
        %1096 = vdwg.mxu0
        %v1097 = vmax.f32 %v1059, 0.0
        %v1098 = vmax.f32 %v1061, 0.0
        %v1099 = vmax.f32 %v1063, 0.0
        %v1100 = vmax.f32 %v1065, 0.0
        %v1101 = vmax.f32 %v1069, 0.0
        %v1102 = vmax.f32 %v1071, 0.0
        %v1103 = vmax.f32 %v1073, 0.0
        %v1104 = vmax.f32 %v1075, 0.0
        %v1105 = vmax.f32 %v1079, 0.0
        %v1106 = vmax.f32 %v1081, 0.0
        %v1107 = vmax.f32 %v1083, 0.0
        %v1108 = vmax.f32 %v1085, 0.0
        %v1109 = vmax.f32 %v1089, 0.0
        %v1110 = vmax.f32 %v1091, 0.0
        %v1111 = vmax.f32 %v1093, 0.0
        %v1112 = vmax.f32 %v1095, 0.0
        %v1113 = vpack.c.bf16 %v1099, %v1097
        %v1114 = vpack.c.bf16 %v1100, %v1098
        %v1115 = vpack.c.bf16 %v1103, %v1101
        %v1116 = vpack.c.bf16 %v1104, %v1102
        %v1117 = vpack.c.bf16 %v1107, %v1105
        %v1118 = vpack.c.bf16 %v1108, %v1106
        %v1119 = vpack.c.bf16 %v1111, %v1109
        %v1120 = vpack.c.bf16 %v1112, %v1110
        %v1121 = vld [vmem:[%s9] sm:$0xf]
        %v1122 = vld [vmem:[%s9 + $0x4] sm:$0xf]
        %v1123 = vld [vmem:[%s9 + $0x8] sm:$0xf]
        %v1124 = vld [vmem:[%s9 + $0xc] sm:$0xf]
        %v1125 = vld [vmem:[%s9 + $0x10] sm:$0xf]
        %v1126 = vld [vmem:[%s9 + $0x14] sm:$0xf]
        %v1127 = vld [vmem:[%s9 + $0x18] sm:$0xf]
        %v1128 = vld [vmem:[%s9 + $0x1c] sm:$0xf]
        %v1129 = vld [vmem:[%s9 + $0x20] sm:$0xf]
        %v1130 = vld [vmem:[%s9 + $0x24] sm:$0xf]
        %v1131 = vld [vmem:[%s9 + $0x28] sm:$0xf]
        %v1132 = vld [vmem:[%s9 + $0x2c] sm:$0xf]
        %v1133 = vld [vmem:[%s9 + $0x30] sm:$0xf]
        %v1134 = vld [vmem:[%s9 + $0x34] sm:$0xf]
        %v1135 = vld [vmem:[%s9 + $0x38] sm:$0xf]
        %v1136 = vld [vmem:[%s9 + $0x3c] sm:$0xf]
        %v1137 = vld [vmem:[%s9 + $0x40] sm:$0xf]
        %v1138 = vld [vmem:[%s9 + $0x44] sm:$0xf]
        %v1139 = vld [vmem:[%s9 + $0x48] sm:$0xf]
        %v1140 = vld [vmem:[%s9 + $0x4c] sm:$0xf]
        %v1141 = vld [vmem:[%s9 + $0x50] sm:$0xf]
        %v1142 = vld [vmem:[%s9 + $0x54] sm:$0xf]
        %v1143 = vld [vmem:[%s9 + $0x58] sm:$0xf]
        %v1144 = vld [vmem:[%s9 + $0x5c] sm:$0xf]
        %v1145 = vld [vmem:[%s9 + $0x60] sm:$0xf]
        %v1146 = vld [vmem:[%s9 + $0x64] sm:$0xf]
        %v1147 = vld [vmem:[%s9 + $0x68] sm:$0xf]
        %v1148 = vld [vmem:[%s9 + $0x6c] sm:$0xf]
        %v1149 = vld [vmem:[%s9 + $0x70] sm:$0xf]
        %v1150 = vld [vmem:[%s9 + $0x74] sm:$0xf]
        %v1151 = vld [vmem:[%s9 + $0x78] sm:$0xf]
        %v1152 = vld [vmem:[%s9 + $0x7c] sm:$0xf]
        %v1153 = vld [vmem:[%s10] sm:$0x1]
        %v1155 = vlaneseq
        %v1156 = vshrl.u32 %v1155, 7
        %v1157 = vsub.s32 0, %v1156
        %v1158 = vrot.slane %v1153, %v1157
        %v1192 = vunpack.c.l.b16 %v1121
        %v1193 = vunpack.c.l.b16 %v1122
        %v1194 = vunpack.c.l.b16 %v1123
        %v1195 = vunpack.c.l.b16 %v1124
        %v1196 = vunpack.c.l.b16 %v1125
        %v1197 = vunpack.c.l.b16 %v1126
        %v1198 = vunpack.c.l.b16 %v1127
        %v1199 = vunpack.c.l.b16 %v1128
        %v1200 = vunpack.c.l.b16 %v1129
        %v1201 = vunpack.c.l.b16 %v1130
        %v1202 = vunpack.c.l.b16 %v1131
        %v1203 = vunpack.c.l.b16 %v1132
        %v1204 = vunpack.c.l.b16 %v1133
        %v1205 = vunpack.c.l.b16 %v1134
        %v1206 = vunpack.c.l.b16 %v1135
        %v1207 = vunpack.c.l.b16 %v1136
        %v1208 = vunpack.c.l.b16 %v1137
        %v1209 = vunpack.c.l.b16 %v1138
        %v1210 = vunpack.c.l.b16 %v1139
        %v1211 = vunpack.c.l.b16 %v1140
        %v1212 = vunpack.c.l.b16 %v1141
        %v1213 = vunpack.c.l.b16 %v1142
        %v1214 = vunpack.c.l.b16 %v1143
        %v1215 = vunpack.c.l.b16 %v1144
        %v1216 = vunpack.c.l.b16 %v1145
        %v1217 = vunpack.c.l.b16 %v1146
        %v1218 = vunpack.c.l.b16 %v1147
        %v1219 = vunpack.c.l.b16 %v1148
        %v1220 = vunpack.c.l.b16 %v1149
        %v1221 = vunpack.c.l.b16 %v1150
        %v1222 = vunpack.c.l.b16 %v1151
        %v1223 = vunpack.c.l.b16 %v1152
        %v1224 = vpack.c.b16 %v1193, %v1192
        %v1225 = vpack.c.b16 %v1195, %v1194
        %v1226 = vpack.c.b16 %v1197, %v1196
        %v1227 = vpack.c.b16 %v1199, %v1198
        %v1228 = vpack.c.b16 %v1201, %v1200
        %v1229 = vpack.c.b16 %v1203, %v1202
        %v1230 = vpack.c.b16 %v1205, %v1204
        %v1231 = vpack.c.b16 %v1207, %v1206
        %v1232 = vpack.c.b16 %v1209, %v1208
        %v1233 = vpack.c.b16 %v1211, %v1210
        %v1234 = vpack.c.b16 %v1213, %v1212
        %v1235 = vpack.c.b16 %v1215, %v1214
        %v1236 = vpack.c.b16 %v1217, %v1216
        %v1237 = vpack.c.b16 %v1219, %v1218
        %v1238 = vpack.c.b16 %v1221, %v1220
        %v1239 = vpack.c.b16 %v1223, %v1222
        %1256 = vmatprep.subr.bf16.mxu0 0
        %1257 = vmatpush1.bf16.msra.mxu0 %v1224
        %1258 = vmatprep.subr.bf16.mxu0 0
        %1259 = vmatpush1.bf16.msra.mxu0 %v1225
        %1260 = vmatprep.subr.bf16.mxu0 0
        %1261 = vmatpush1.bf16.msra.mxu0 %v1226
        %1262 = vmatprep.subr.bf16.mxu0 0
        %1263 = vmatpush1.bf16.msra.mxu0 %v1227
        %1264 = vmatprep.subr.bf16.mxu0 0
        %1265 = vmatpush1.bf16.msra.mxu0 %v1228
        %1266 = vmatprep.subr.bf16.mxu0 0
        %1267 = vmatpush1.bf16.msra.mxu0 %v1229
        %1268 = vmatprep.subr.bf16.mxu0 0
        %1269 = vmatpush1.bf16.msra.mxu0 %v1230
        %1270 = vmatprep.subr.bf16.mxu0 0
        %1271 = vmatpush1.bf16.msra.mxu0 %v1231
        %1272 = vmatprep.subr.bf16.mxu0 0
        %1273 = vmatpush1.bf16.msra.mxu0 %v1232
        %1274 = vmatprep.subr.bf16.mxu0 0
        %1275 = vmatpush1.bf16.msra.mxu0 %v1233
        %1276 = vmatprep.subr.bf16.mxu0 0
        %1277 = vmatpush1.bf16.msra.mxu0 %v1234
        %1278 = vmatprep.subr.bf16.mxu0 0
        %1279 = vmatpush1.bf16.msra.mxu0 %v1235
        %1280 = vmatprep.subr.bf16.mxu0 0
        %1281 = vmatpush1.bf16.msra.mxu0 %v1236
        %1282 = vmatprep.subr.bf16.mxu0 0
        %1283 = vmatpush1.bf16.msra.mxu0 %v1237
        %1284 = vmatprep.subr.bf16.mxu0 0
        %1285 = vmatpush1.bf16.msra.mxu0 %v1238
        %1286 = vmatprep.subr.bf16.mxu0 0
        %1287 = vmatpush1.bf16.msra.mxu0 %v1239
        %1288 = vmatprep.mubr.bf16.mxu0 %v1114
        %1289 = vmatmul.mubr.bf16.gmra.mrb[0].mxu0 %v1113
        %v1290 = vpop.f32.mrb[0].mxu0
        %v1291 = vadd.f32 %v1158, %v1290
        %v1292 = vpop.f32.mrb[0].mxu0
        %v1293 = vpop.f32.mrb[0].mxu0
        %v1294 = vadd.f32 %v1158, %v1293
        %v1295 = vpop.f32.mrb[0].mxu0
        %1296 = vmatprep.mubr.bf16.mxu0 %v1116
        %1297 = vmatmul.mubr.bf16.gmra.mrb[0].mxu0 %v1115
        %v1298 = vpop.f32.mrb[0].mxu0
        %v1299 = vadd.f32 %v1158, %v1298
        %v1300 = vpop.f32.mrb[0].mxu0
        %v1301 = vpop.f32.mrb[0].mxu0
        %v1302 = vadd.f32 %v1158, %v1301
        %v1303 = vpop.f32.mrb[0].mxu0
        %1304 = vmatprep.mubr.bf16.mxu0 %v1118
        %1305 = vmatmul.mubr.bf16.gmra.mrb[0].mxu0 %v1117
        %v1306 = vpop.f32.mrb[0].mxu0
        %v1307 = vadd.f32 %v1158, %v1306
        %v1308 = vpop.f32.mrb[0].mxu0
        %v1309 = vpop.f32.mrb[0].mxu0
        %v1310 = vadd.f32 %v1158, %v1309
        %v1311 = vpop.f32.mrb[0].mxu0
        %1312 = vmatprep.mubr.bf16.mxu0 %v1120
        %1313 = vmatmul.mubr.bf16.gmra.mrb[0].mxu0 %v1119
        %v1314 = vpop.f32.mrb[0].mxu0
        %v1315 = vadd.f32 %v1158, %v1314
        %v1316 = vpop.f32.mrb[0].mxu0
        %v1317 = vpop.f32.mrb[0].mxu0
        %v1318 = vadd.f32 %v1158, %v1317
        %v1319 = vpop.f32.mrb[0].mxu0
        %1320 = vdwg.mxu0
        %v1321 = vmax.f32 %v1291, 0.0
        %v1322 = vmax.f32 %v1294, 0.0
        %v1323 = vmax.f32 %v1299, 0.0
        %v1324 = vmax.f32 %v1302, 0.0
        %v1325 = vmax.f32 %v1307, 0.0
        %v1326 = vmax.f32 %v1310, 0.0
        %v1327 = vmax.f32 %v1315, 0.0
        %v1328 = vmax.f32 %v1318, 0.0
        %v1329 = vpack.c.bf16 %v1322, %v1321
        %v1330 = vpack.c.bf16 %v1324, %v1323
        %v1331 = vpack.c.bf16 %v1326, %v1325
        %v1332 = vpack.c.bf16 %v1328, %v1327
        %v1333 = vld [vmem:[%s11] sm:$0xf]
        %v1334 = vld [vmem:[%s11 + $0x4] sm:$0xf]
        %v1335 = vld [vmem:[%s11 + $0x8] sm:$0xf]
        %v1336 = vld [vmem:[%s11 + $0xc] sm:$0xf]
        %v1337 = vld [vmem:[%s12] sm:$0x1]
        %v1339 = vlaneseq
        %v1340 = vshrl.u32 %v1339, 7
        %v1341 = vsub.s32 0, %v1340
        %v1342 = vrot.slane %v1337, %v1341
        %v1348 = vunpack.c.l.b16 %v1333
        %v1349 = vunpack.c.l.b16 %v1334
        %v1350 = vunpack.c.l.b16 %v1335
        %v1351 = vunpack.c.l.b16 %v1336
        %v1352 = vpack.c.b16 %v1349, %v1348
        %v1353 = vpack.c.b16 %v1351, %v1350
        %vm1356 = vcmask 261120
        %v1358 = vsel %vm1356, %v1329, 0
        %v1361 = vsel %vm1356, %v1330, 0
        %v1364 = vsel %vm1356, %v1331, 0
        %v1367 = vsel %vm1356, %v1332, 0
        %1369 = vmatprep.subr.bf16.mxu0 0
        %1370 = vmatpush1.bf16.msra.mxu0 %v1352
        %1371 = vmatprep.subr.bf16.mxu0 0
        %1372 = vmatpush1.bf16.msra.mxu0 %v1353
        %1373 = vmatprep.subr.bf16.mxu0 0
        %1374 = vmatpush1.bf16.msra.mxu0 0
        %1375 = vmatprep.subr.bf16.mxu0 0
        %1376 = vmatpush1.bf16.msra.mxu0 0
        %1377 = vmatprep.subr.bf16.mxu0 0
        %1378 = vmatpush1.bf16.msra.mxu0 0
        %1379 = vmatprep.subr.bf16.mxu0 0
        %1380 = vmatpush1.bf16.msra.mxu0 0
        %1381 = vmatprep.subr.bf16.mxu0 0
        %1382 = vmatpush1.bf16.msra.mxu0 0
        %1383 = vmatprep.subr.bf16.mxu0 0
        %1384 = vmatpush1.bf16.msra.mxu0 0
        %1385 = vmatprep.subr.bf16.mxu0 0
        %1386 = vmatpush1.bf16.msra.mxu0 0
        %1387 = vmatprep.subr.bf16.mxu0 0
        %1388 = vmatpush1.bf16.msra.mxu0 0
        %1389 = vmatprep.subr.bf16.mxu0 0
        %1390 = vmatpush1.bf16.msra.mxu0 0
        %1391 = vmatprep.subr.bf16.mxu0 0
        %1392 = vmatpush1.bf16.msra.mxu0 0
        %1393 = vmatprep.subr.bf16.mxu0 0
        %1394 = vmatpush1.bf16.msra.mxu0 0
        %1395 = vmatprep.subr.bf16.mxu0 0
        %1396 = vmatpush1.bf16.msra.mxu0 0
        %1397 = vmatprep.subr.bf16.mxu0 0
        %1398 = vmatpush1.bf16.msra.mxu0 0
        %1399 = vmatprep.subr.bf16.mxu0 0
        %1400 = vmatpush1.bf16.msra.mxu0 0
        %1401 = vmatprep.mubr.bf16.mxu0 0
        %1402 = vmatmul.mubr.bf16.gmra.mrb[0].mxu0 %v1358
        %v1403 = vpop.f32.mrb[0].mxu0
        %v1404 = vadd.f32 %v1342, %v1403
        %v1405 = vpop.f32.mrb[0].mxu0
        %v1406 = vpop.f32.mrb[0].mxu0
        %v1407 = vadd.f32 %v1342, %v1406
        %v1408 = vpop.f32.mrb[0].mxu0
        %1409 = vmatprep.mubr.bf16.mxu0 0
        %1410 = vmatmul.mubr.bf16.gmra.mrb[0].mxu0 %v1361
        %v1411 = vpop.f32.mrb[0].mxu0
        %v1412 = vadd.f32 %v1342, %v1411
        %v1413 = vpop.f32.mrb[0].mxu0
        %v1414 = vpop.f32.mrb[0].mxu0
        %v1415 = vadd.f32 %v1342, %v1414
        %v1416 = vpop.f32.mrb[0].mxu0
        %1417 = vmatprep.mubr.bf16.mxu0 0
        %1418 = vmatmul.mubr.bf16.gmra.mrb[0].mxu0 %v1364
        %v1419 = vpop.f32.mrb[0].mxu0
        %v1420 = vadd.f32 %v1342, %v1419
        %v1421 = vpop.f32.mrb[0].mxu0
        %v1422 = vpop.f32.mrb[0].mxu0
        %v1423 = vadd.f32 %v1342, %v1422
        %v1424 = vpop.f32.mrb[0].mxu0
        %1425 = vmatprep.mubr.bf16.mxu0 0
        %1426 = vmatmul.mubr.bf16.gmra.mrb[0].mxu0 %v1367
        %v1427 = vpop.f32.mrb[0].mxu0
        %v1428 = vadd.f32 %v1342, %v1427
        %v1429 = vpop.f32.mrb[0].mxu0
        %v1430 = vpop.f32.mrb[0].mxu0
        %v1431 = vadd.f32 %v1342, %v1430
        %v1432 = vpop.f32.mrb[0].mxu0
        %1433 = vdwg.mxu0
        %1434 = vxpose.xlu0.b32.start [1/16] %v1404, 128
        %1435 = vxpose.xlu0.b32.cont [2/16] %v1407, 128
        %1436 = vxpose.xlu0.b32.cont [3/16] %v1412, 128
        %1437 = vxpose.xlu0.b32.cont [4/16] %v1415, 128
        %1438 = vxpose.xlu0.b32.cont [5/16] %v1420, 128
        %1439 = vxpose.xlu0.b32.cont [6/16] %v1423, 128
        %1440 = vxpose.xlu0.b32.cont [7/16] %v1428, 128
        %1441 = vxpose.xlu0.b32.cont [8/16] %v1431, 128
        %1442 = vxpose.xlu0.b32.cont [9/16] 0.0, 128
        %1443 = vxpose.xlu0.b32.cont [10/16] 0.0, 128
        %1444 = vxpose.xlu0.b32.cont [11/16] 0.0, 128
        %1445 = vxpose.xlu0.b32.cont [12/16] 0.0, 128
        %1446 = vxpose.xlu0.b32.cont [13/16] 0.0, 128
        %1447 = vxpose.xlu0.b32.cont [14/16] 0.0, 128
        %1448 = vxpose.xlu0.b32.cont [15/16] 0.0, 128
        %1449 = vxpose.xlu0.b32.end [16/16] 0.0, 128
        %v1450 = vpop.trf.xlu0
        %v1451 = vpop.trf.xlu0
        %v1452 = vpop.trf.xlu0
        %v1453 = vpop.trf.xlu0
        %v1454 = vpop.trf.xlu0
        %v1455 = vpop.trf.xlu0
        %v1456 = vpop.trf.xlu0
        %v1457 = vpop.trf.xlu0
        %v1458 = vpop.trf.xlu0
        %v1459 = vpop.trf.xlu0
        %v1460 = vpop.trf.xlu0
        %v1461 = vpop.trf.xlu0
        %v1462 = vpop.trf.xlu0
        %v1463 = vpop.trf.xlu0
        %v1464 = vpop.trf.xlu0
        %v1465 = vpop.trf.xlu0
        %1466 = vst.msk [vmem:[%s474] sm:$0xff] %vm562, %v1450
        %1467 = vst.msk [vmem:[%s474 + $0x8] sm:$0xff] %vm562, %v1451
        %1468 = vst.msk [vmem:[%s474 + $0x10] sm:$0xff] %vm562, %v1452
        %1469 = vst.msk [vmem:[%s474 + $0x18] sm:$0xff] %vm562, %v1453
        %s1470 = sand.u32 %s336, 1
        %s1471 = scalar_lea.sflag [#allocation3], %s1470
        %s1472 = sand.u32 %s336, 1
        %s1473 = smul.addr %s1472, 32
        %s1474 = scalar_lea.vmem [#allocation2], %s1473
        // Predicated region
        $region73: #{pointnet_encoder_forward.3} parent=71 // pred_check
          %p1475 = pneg %p346
        $region74: #{pointnet_encoder_forward.3} parent=71 // pred_check_branch
          %1477 = sbr.rel (%p1475) target = $region76
        $region75: #{pointnet_encoder_forward.3} parent=71 // pred_region
          %s1479 = ssub.s32 512, 512
          %1480 = vsyncadd %s1471, %s1479
          %s1481 = smul.addr %s31, 4
          %s1482 = sadd.s32 %s32, %s1481
          %s1483 = smul.addr %s1482, 128
          %s1484 = scalar_lea.hbm %s13, %s1483
          %s1485 = sshll.u32 %s1474, 4
          %s1486 = int_to_ptr.vmem [resolvable:$true] %s1485
          %1491 = dma.vmem_to_hbm [thread:$0]  %s1486, 512, %s1484, %s1471, 128, 128, 8
        $region76: #{pointnet_encoder_forward.3} parent=71 // pred_fallthru
          _
      $region72: #{pointnet_encoder_forward.3} parent=5 // pred_fallthru
        _
      %p1492 = scmp.le.s32.totalorder 2, %s22
      // Predicated region
      $region77: #{pointnet_encoder_forward.3} parent=5 // pred_check
        %p1493 = pneg %p1492
      $region78: #{pointnet_encoder_forward.3} parent=5 // pred_check_branch
        %1495 = sbr.rel (%p1493) target = $region80
      $region79: #{pointnet_encoder_forward.3} parent=5 // pred_region
        %s1496 = ssub.s32 %s22, 2
        // Predicated region
        $region81: #{pointnet_encoder_forward.3} parent=79 // pred_check
          %p1497 = pneg %p352
        $region82: #{pointnet_encoder_forward.3} parent=79 // pred_check_branch
          %1499 = sbr.rel (%p1497) target = $region84
        $region83: #{pointnet_encoder_forward.3} parent=79 // pred_region
          %s1500 = sand.u32 %s337, 1
          %s1501 = scalar_lea.sflag [#allocation3], %s1500
          %s1502 = sand.u32 %s337, 1
          %s1503 = smul.addr %s1502, 32
          %s1504 = scalar_lea.vmem [#allocation2], %s1503
          %1505 = dma.done %s1501, 512
        $region84: #{pointnet_encoder_forward.3} parent=79 // pred_fallthru
          _
      $region80: #{pointnet_encoder_forward.3} parent=5 // pred_fallthru
        _
    $region6: #{pointnet_encoder_forward.3} parent=1 // loop_footer
      %s26 = sadd.s32 1, %s22
    $region7: #{pointnet_encoder_forward.3} parent=1 // loop_footer_branch
      %21 = sbr.rel target = $region3
    $region8: #{pointnet_encoder_forward.3} parent=1 // loop_exit
      _
    %1506 = vsyncpa [#allocation3], 1
    %s1507 = scalar_lea.sflag [#allocation3], 1
    %1508 = vsyncpa %s1507, 1

</llo_original>
